<compile_context>
chip_gen: v7x
topology: tpu7x:2x2x1
jax: 0.10.0
libtpu: 0.0.40
codegen_flags: <defaults>
</compile_context>

<pallas_src>
import functools
import numpy as np
import jax
import jax.numpy as jnp
from jax.experimental import pallas as pl
from jax.experimental.pallas import tpu as pltpu


def _pick_bt(B):
    """Batch items per grid step: amortize per-step overhead while keeping
    at least 2 grid steps (pipelining / megacore) whenever possible."""
    for bt in (8, 4, 2):
        if B % bt == 0 and B // bt >= 2:
            return bt
    return 1


def _make_kernel(H, W, C, M, Bt):
    HW = H * W
    inv_hw = 1.0 / float(HW)

    def kernel(x_ref, w_ref, mask_ref, bnb_ref, wfc1_ref, f1b_ref, wfc2_ref,
               o_ref, br_ref):
        # x_ref/o_ref: (Bt, C, HW)   (C on sublanes, H*W on lanes -> lane dense)
        # w_ref:    (M*9, C, 1)   depthwise tap weights, BN scale folded in
        # mask_ref: (M*9, 1, HW)  0/1 zero-padding masks for rolled taps
        # bnb_ref:  (M, C, 1)     folded BN bias per branch
        # wfc1_ref: (C, d)        fc1 weight (BN scale folded), f1b_ref: (1, d)
        # wfc2_ref: (M, C, d)
        # br_ref:   VMEM scratch (M, C, HW) for the branch outputs
        for b in range(Bt):
            x = x_ref[b]                                        # (C, HW)
            s_sum = jnp.zeros((C, 1), jnp.float32)

            # ---- M dilated depthwise 3x3 branches (pure VPU/XLU) ----
            for m in range(M):
                dil = m + 1
                acc = jnp.zeros((C, HW), jnp.float32)
                for ky in range(3):
                    for kx in range(3):
                        t = m * 9 + ky * 3 + kx
                        dy = (ky - 1) * dil
                        dx = (kx - 1) * dil
                        off = dy * W + dx
                        if off == 0:
                            tap = x
                        else:
                            # out[i] = x[i + off]  (wrap-around, zeroed by mask)
                            tap = pltpu.roll(x, shift=(-off) % HW, axis=1)
                            tap = tap * mask_ref[t]             # (1, HW) bcast
                        acc = acc + tap * w_ref[t]              # (C, 1) bcast
                out_m = jnp.maximum(acc + bnb_ref[m], 0.0)      # folded BN + ReLU
                br_ref[m] = out_m
                s_sum = s_sum + jnp.sum(out_m, axis=1, keepdims=True)

            # ---- gating: global avg pool -> fc1 -> fc2 -> softmax over M ----
            s = s_sum * inv_hw                                  # (C, 1)  pool(U)
            z = jnp.maximum(
                jnp.sum(wfc1_ref[...] * s, axis=0, keepdims=True)
                + f1b_ref[...], 0.0)                            # (1, d)
            logits = [jnp.sum(wfc2_ref[m] * z, axis=1, keepdims=True)
                      for m in range(M)]                        # each (C, 1)
            mx = logits[0]
            for m in range(1, M):
                mx = jnp.maximum(mx, logits[m])
            es = [jnp.exp(l - mx) for l in logits]
            denom = es[0]
            for m in range(1, M):
                denom = denom + es[m]
            inv = pl.reciprocal(denom, approx=True)             # EUP, off VALU path

            # ---- weighted sum of branches ----
            V = br_ref[0] * (es[0] * inv)
            for m in range(1, M):
                V = V + br_ref[m] * (es[m] * inv)
            o_ref[b] = V.astype(o_ref.dtype)

    return kernel


def sknet_pallas(x_nchw, params):
    wdw, bnb, wfc1, f1b, wfc2 = params
    B, C, H, W = x_nchw.shape
    M, _, d = wfc2.shape
    HW = H * W
    assert wdw.shape == (M * 9, C, 1), "depthwise (Cin == Cout == groups) only"
    Bt = _pick_bt(B)

    # Precomputed 0/1 zero-padding masks per tap (constants, built on host).
    hh = np.arange(HW, dtype=np.int64) // W
    ww = np.arange(HW, dtype=np.int64) % W
    masks = np.ones((M * 9, 1, HW), np.float32)
    for m in range(M):
        dil = m + 1
        for ky in range(3):
            for kx in range(3):
                dy, dx = (ky - 1) * dil, (kx - 1) * dil
                valid = ((hh + dy >= 0) & (hh + dy < H) &
                         (ww + dx >= 0) & (ww + dx < W))
                masks[m * 9 + ky * 3 + kx, 0, :] = valid.astype(np.float32)
    masks = jnp.asarray(masks)

    # NCHW -> (B, C, H*W) is a free contiguous reshape (no transpose, no pad).
    x3 = x_nchw.astype(jnp.float32).reshape(B, C, HW)

    kernel = _make_kernel(H, W, C, M, Bt)
    out = pl.pallas_call(
        kernel,
        out_shape=jax.ShapeDtypeStruct((B, C, HW), jnp.float32),
        grid_spec=pltpu.PrefetchScalarGridSpec(
            num_scalar_prefetch=0,
            grid=(B // Bt,),
            in_specs=[
                pl.BlockSpec((Bt, C, HW), lambda i: (i, 0, 0)),
                pl.BlockSpec((M * 9, C, 1), lambda i: (0, 0, 0)),
                pl.BlockSpec((M * 9, 1, HW), lambda i: (0, 0, 0)),
                pl.BlockSpec((M, C, 1), lambda i: (0, 0, 0)),
                pl.BlockSpec((C, d), lambda i: (0, 0)),
                pl.BlockSpec((1, d), lambda i: (0, 0)),
                pl.BlockSpec((M, C, d), lambda i: (0, 0, 0)),
            ],
            out_specs=pl.BlockSpec((Bt, C, HW), lambda i: (i, 0, 0)),
            scratch_shapes=[pltpu.VMEM((M, C, HW), jnp.float32)],
        ),
        compiler_params=pltpu.CompilerParams(
            dimension_semantics=("parallel",)),
    )(x3, wdw, masks, bnb, wfc1, f1b, wfc2)
    return out.reshape(B, C, H, W)


def init_params(key, C, M=2, r=16, L=32, G=32, eps=1e-5):
    """Deterministic synthetic parameters matching SKNet.__init__ shapes.
    BatchNorms use folded inference (running-stats) semantics; BN scales are
    folded into the conv / fc1 weights."""
    assert C == G, "depthwise path requires in_channels == out_channels == groups"
    d = max(C // r, L)
    keys = iter(jax.random.split(key, 5 * M + 6))

    wdw_rows, bnb_rows = [], []
    for _ in range(M):
        w = 0.1 * jax.random.normal(next(keys), (C, 3, 3), jnp.float32)  # (Cout,1,3,3) squeezed
        gamma = 1.0 + 0.1 * jax.random.normal(next(keys), (C,), jnp.float32)
        beta = 0.1 * jax.random.normal(next(keys), (C,), jnp.float32)
        mean = 0.1 * jax.random.normal(next(keys), (C,), jnp.float32)
        var = 0.5 + 0.1 * jnp.abs(jax.random.normal(next(keys), (C,), jnp.float32))
        sc = gamma / jnp.sqrt(var + eps)
        bnb_rows.append((beta - mean * sc)[:, None])                     # (C, 1)
        w_sc = w * sc[:, None, None]                                     # fold BN scale
        wdw_rows.append(jnp.transpose(w_sc, (1, 2, 0)).reshape(9, C)[:, :, None])
    wdw = jnp.concatenate(wdw_rows, axis=0)                              # (M*9, C, 1)
    bnb = jnp.stack(bnb_rows, axis=0)                                    # (M, C, 1)

    # fc1 (1x1 conv C->d) with folded BN scale; bias kept separately.
    w1 = 0.1 * jax.random.normal(next(keys), (d, C), jnp.float32)
    g1 = 1.0 + 0.1 * jax.random.normal(next(keys), (d,), jnp.float32)
    b1 = 0.1 * jax.random.normal(next(keys), (d,), jnp.float32)
    m1 = 0.1 * jax.random.normal(next(keys), (d,), jnp.float32)
    v1 = 0.5 + 0.1 * jnp.abs(jax.random.normal(next(keys), (d,), jnp.float32))
    s1 = g1 / jnp.sqrt(v1 + eps)
    wfc1 = (w1 * s1[:, None]).T                                          # (C, d)
    f1b = (b1 - m1 * s1)[None, :]                                        # (1, d)

    # fc2 (1x1 conv d -> M*C), split per branch: wfc2[m, c, :] = W2[m*C + c, :]
    w2 = 0.1 * jax.random.normal(next(keys), (M * C, d), jnp.float32)
    wfc2 = w2.reshape(M, C, d)
    return (wdw, bnb, wfc1, f1b, wfc2)


def sknet_ref(x_nchw, params):
    """Pure-JAX reference with identical semantics (for verification)."""
    wdw, bnb, wfc1, f1b, wfc2 = params
    B, C, H, W = x_nchw.shape
    M = wfc2.shape[0]
    x = x_nchw.astype(jnp.float32)
    outs = []
    for m in range(M):
        dil = m + 1
        xp = jnp.pad(x, ((0, 0), (0, 0), (dil, dil), (dil, dil)))
        acc = jnp.zeros((B, C, H, W), jnp.float32)
        for ky in range(3):
            for kx in range(3):
                tap = xp[:, :, ky * dil:ky * dil + H, kx * dil:kx * dil + W]
                w = wdw[m * 9 + ky * 3 + kx, :, 0]
                acc = acc + tap * w[None, :, None, None]
        outs.append(jnp.maximum(acc + bnb[m, :, 0][None, :, None, None], 0.0))
    U = functools.reduce(lambda a, b: a + b, outs)
    s = U.mean(axis=(2, 3))                                              # (B, C)
    z = jnp.maximum(s @ wfc1 + f1b, 0.0)                                 # (B, d)
    logits = jnp.einsum('bd,mcd->bmc', z, wfc2)                          # (B, M, C)
    att = jax.nn.softmax(logits, axis=1)
    V = functools.reduce(lambda a, b: a + b,
                         [outs[m] * att[:, m][:, :, None, None] for m in range(M)])
    return V


if __name__ == "__main__":
    key = jax.random.PRNGKey(0)
    kx, kp = jax.random.split(key)
    # groups=32 in the module => channels must be 32 for the depthwise case.
    B, C, H, W, M = 2, 32, 16, 16, 2
    x = jax.random.normal(kx, (B, C, H, W), jnp.float32)
    params = init_params(kp, C, M=M)

    out = jax.jit(sknet_pallas)(x, params)
    out = jax.block_until_ready(out)

    ref = sknet_ref(x, params)
    np.testing.assert_allclose(np.asarray(out), np.asarray(ref),
                               rtol=1e-2, atol=1e-2)
    print("KERNEL_OK")
</pallas_src>

<mosaic_0001>
module attributes {stable_mosaic.version = 11 : i64} {
  func.func @kernel(%arg0: i32, %arg1: memref<1x32x256xf32, #tpu.memory_space<vmem>>, %arg2: memref<18x32x1xf32, #tpu.memory_space<vmem>>, %arg3: memref<18x1x256xf32, #tpu.memory_space<vmem>>, %arg4: memref<2x32x1xf32, #tpu.memory_space<vmem>>, %arg5: memref<32x32xf32, #tpu.memory_space<vmem>>, %arg6: memref<1x32xf32, #tpu.memory_space<vmem>>, %arg7: memref<2x32x32xf32, #tpu.memory_space<vmem>>, %arg8: memref<1x32x256xf32, #tpu.memory_space<vmem>>, %arg9: memref<2x32x256xf32, #tpu.memory_space<vmem>>) attributes {dimension_semantics = [#tpu.dimension_semantics<parallel>], iteration_bounds = array<i64: 2>, scalar_prefetch = 0 : i64, scratch_operands = 1 : i64, tpu.core_type = #tpu.core_type<tc>, window_params = [{transform_indices = @transform_0, window_bounds = array<i64: 1, 32, 256>}, {pipeline_mode = #tpu.pipeline_mode<synchronous>, transform_indices = @transform_1, window_bounds = array<i64: 18, 32, 1>}, {pipeline_mode = #tpu.pipeline_mode<synchronous>, transform_indices = @transform_2, window_bounds = array<i64: 18, 1, 256>}, {pipeline_mode = #tpu.pipeline_mode<synchronous>, transform_indices = @transform_3, window_bounds = array<i64: 2, 32, 1>}, {pipeline_mode = #tpu.pipeline_mode<synchronous>, transform_indices = @transform_4, window_bounds = array<i64: 32, 32>}, {pipeline_mode = #tpu.pipeline_mode<synchronous>, transform_indices = @transform_5, window_bounds = array<i64: 1, 32>}, {pipeline_mode = #tpu.pipeline_mode<synchronous>, transform_indices = @transform_6, window_bounds = array<i64: 2, 32, 32>}, {transform_indices = @transform_7, window_bounds = array<i64: 1, 32, 256>}]} {
    %c0 = arith.constant 0 : index
    %c0_0 = arith.constant 0 : index
    %c0_1 = arith.constant 0 : index
    %0 = vector.load %arg1[%c0, %c0_0, %c0_1] : memref<1x32x256xf32, #tpu.memory_space<vmem>>, vector<1x32x256xf32>
    %1 = vector.shape_cast %0 : vector<1x32x256xf32> to vector<32x256xf32>
    %cst = arith.constant 0.000000e+00 : f32
    %2 = vector.broadcast %cst : f32 to vector<32x1xf32>
    %cst_2 = arith.constant 0.000000e+00 : f32
    %3 = vector.broadcast %cst_2 : f32 to vector<32x256xf32>
    %c17_i32 = arith.constant 17 : i32
    %4 = tpu.dynamic_rotate %1 by %c17_i32 dim 1 : vector<32x256xf32>, i32 -> vector<32x256xf32>
    %c0_3 = arith.constant 0 : index
    %c0_4 = arith.constant 0 : index
    %c0_5 = arith.constant 0 : index
    %5 = vector.load %arg3[%c0_3, %c0_4, %c0_5] : memref<18x1x256xf32, #tpu.memory_space<vmem>>, vector<1x1x256xf32>
    %6 = vector.shape_cast %5 : vector<1x1x256xf32> to vector<1x256xf32>
    %7 = vector.broadcast %6 : vector<1x256xf32> to vector<32x256xf32>
    %8 = arith.mulf %4, %7 : vector<32x256xf32>
    %c0_6 = arith.constant 0 : index
    %c0_7 = arith.constant 0 : index
    %c0_8 = arith.constant 0 : index
    %9 = vector.load %arg2[%c0_6, %c0_7, %c0_8] : memref<18x32x1xf32, #tpu.memory_space<vmem>>, vector<1x32x1xf32>
    %10 = vector.shape_cast %9 : vector<1x32x1xf32> to vector<32x1xf32>
    %11 = vector.broadcast %10 : vector<32x1xf32> to vector<32x256xf32>
    %12 = arith.mulf %8, %11 : vector<32x256xf32>
    %13 = arith.addf %3, %12 : vector<32x256xf32>
    %c16_i32 = arith.constant 16 : i32
    %14 = tpu.dynamic_rotate %1 by %c16_i32 dim 1 : vector<32x256xf32>, i32 -> vector<32x256xf32>
    %c1 = arith.constant 1 : index
    %c0_9 = arith.constant 0 : index
    %c0_10 = arith.constant 0 : index
    %15 = vector.load %arg3[%c1, %c0_9, %c0_10] : memref<18x1x256xf32, #tpu.memory_space<vmem>>, vector<1x1x256xf32>
    %16 = vector.shape_cast %15 : vector<1x1x256xf32> to vector<1x256xf32>
    %17 = vector.broadcast %16 : vector<1x256xf32> to vector<32x256xf32>
    %18 = arith.mulf %14, %17 : vector<32x256xf32>
    %c1_11 = arith.constant 1 : index
    %c0_12 = arith.constant 0 : index
    %c0_13 = arith.constant 0 : index
    %19 = vector.load %arg2[%c1_11, %c0_12, %c0_13] : memref<18x32x1xf32, #tpu.memory_space<vmem>>, vector<1x32x1xf32>
    %20 = vector.shape_cast %19 : vector<1x32x1xf32> to vector<32x1xf32>
    %21 = vector.broadcast %20 : vector<32x1xf32> to vector<32x256xf32>
    %22 = arith.mulf %18, %21 : vector<32x256xf32>
    %23 = arith.addf %13, %22 : vector<32x256xf32>
    %c15_i32 = arith.constant 15 : i32
    %24 = tpu.dynamic_rotate %1 by %c15_i32 dim 1 : vector<32x256xf32>, i32 -> vector<32x256xf32>
    %c2 = arith.constant 2 : index
    %c0_14 = arith.constant 0 : index
    %c0_15 = arith.constant 0 : index
    %25 = vector.load %arg3[%c2, %c0_14, %c0_15] : memref<18x1x256xf32, #tpu.memory_space<vmem>>, vector<1x1x256xf32>
    %26 = vector.shape_cast %25 : vector<1x1x256xf32> to vector<1x256xf32>
    %27 = vector.broadcast %26 : vector<1x256xf32> to vector<32x256xf32>
    %28 = arith.mulf %24, %27 : vector<32x256xf32>
    %c2_16 = arith.constant 2 : index
    %c0_17 = arith.constant 0 : index
    %c0_18 = arith.constant 0 : index
    %29 = vector.load %arg2[%c2_16, %c0_17, %c0_18] : memref<18x32x1xf32, #tpu.memory_space<vmem>>, vector<1x32x1xf32>
    %30 = vector.shape_cast %29 : vector<1x32x1xf32> to vector<32x1xf32>
    %31 = vector.broadcast %30 : vector<32x1xf32> to vector<32x256xf32>
    %32 = arith.mulf %28, %31 : vector<32x256xf32>
    %33 = arith.addf %23, %32 : vector<32x256xf32>
    %c1_i32 = arith.constant 1 : i32
    %34 = tpu.dynamic_rotate %1 by %c1_i32 dim 1 : vector<32x256xf32>, i32 -> vector<32x256xf32>
    %c3 = arith.constant 3 : index
    %c0_19 = arith.constant 0 : index
    %c0_20 = arith.constant 0 : index
    %35 = vector.load %arg3[%c3, %c0_19, %c0_20] : memref<18x1x256xf32, #tpu.memory_space<vmem>>, vector<1x1x256xf32>
    %36 = vector.shape_cast %35 : vector<1x1x256xf32> to vector<1x256xf32>
    %37 = vector.broadcast %36 : vector<1x256xf32> to vector<32x256xf32>
    %38 = arith.mulf %34, %37 : vector<32x256xf32>
    %c3_21 = arith.constant 3 : index
    %c0_22 = arith.constant 0 : index
    %c0_23 = arith.constant 0 : index
    %39 = vector.load %arg2[%c3_21, %c0_22, %c0_23] : memref<18x32x1xf32, #tpu.memory_space<vmem>>, vector<1x32x1xf32>
    %40 = vector.shape_cast %39 : vector<1x32x1xf32> to vector<32x1xf32>
    %41 = vector.broadcast %40 : vector<32x1xf32> to vector<32x256xf32>
    %42 = arith.mulf %38, %41 : vector<32x256xf32>
    %43 = arith.addf %33, %42 : vector<32x256xf32>
    %c4 = arith.constant 4 : index
    %c0_24 = arith.constant 0 : index
    %c0_25 = arith.constant 0 : index
    %44 = vector.load %arg2[%c4, %c0_24, %c0_25] : memref<18x32x1xf32, #tpu.memory_space<vmem>>, vector<1x32x1xf32>
    %45 = vector.shape_cast %44 : vector<1x32x1xf32> to vector<32x1xf32>
    %46 = vector.broadcast %45 : vector<32x1xf32> to vector<32x256xf32>
    %47 = arith.mulf %1, %46 : vector<32x256xf32>
    %48 = arith.addf %43, %47 : vector<32x256xf32>
    %c255_i32 = arith.constant 255 : i32
    %49 = tpu.dynamic_rotate %1 by %c255_i32 dim 1 : vector<32x256xf32>, i32 -> vector<32x256xf32>
    %c5 = arith.constant 5 : index
    %c0_26 = arith.constant 0 : index
    %c0_27 = arith.constant 0 : index
    %50 = vector.load %arg3[%c5, %c0_26, %c0_27] : memref<18x1x256xf32, #tpu.memory_space<vmem>>, vector<1x1x256xf32>
    %51 = vector.shape_cast %50 : vector<1x1x256xf32> to vector<1x256xf32>
    %52 = vector.broadcast %51 : vector<1x256xf32> to vector<32x256xf32>
    %53 = arith.mulf %49, %52 : vector<32x256xf32>
    %c5_28 = arith.constant 5 : index
    %c0_29 = arith.constant 0 : index
    %c0_30 = arith.constant 0 : index
    %54 = vector.load %arg2[%c5_28, %c0_29, %c0_30] : memref<18x32x1xf32, #tpu.memory_space<vmem>>, vector<1x32x1xf32>
    %55 = vector.shape_cast %54 : vector<1x32x1xf32> to vector<32x1xf32>
    %56 = vector.broadcast %55 : vector<32x1xf32> to vector<32x256xf32>
    %57 = arith.mulf %53, %56 : vector<32x256xf32>
    %58 = arith.addf %48, %57 : vector<32x256xf32>
    %c241_i32 = arith.constant 241 : i32
    %59 = tpu.dynamic_rotate %1 by %c241_i32 dim 1 : vector<32x256xf32>, i32 -> vector<32x256xf32>
    %c6 = arith.constant 6 : index
    %c0_31 = arith.constant 0 : index
    %c0_32 = arith.constant 0 : index
    %60 = vector.load %arg3[%c6, %c0_31, %c0_32] : memref<18x1x256xf32, #tpu.memory_space<vmem>>, vector<1x1x256xf32>
    %61 = vector.shape_cast %60 : vector<1x1x256xf32> to vector<1x256xf32>
    %62 = vector.broadcast %61 : vector<1x256xf32> to vector<32x256xf32>
    %63 = arith.mulf %59, %62 : vector<32x256xf32>
    %c6_33 = arith.constant 6 : index
    %c0_34 = arith.constant 0 : index
    %c0_35 = arith.constant 0 : index
    %64 = vector.load %arg2[%c6_33, %c0_34, %c0_35] : memref<18x32x1xf32, #tpu.memory_space<vmem>>, vector<1x32x1xf32>
    %65 = vector.shape_cast %64 : vector<1x32x1xf32> to vector<32x1xf32>
    %66 = vector.broadcast %65 : vector<32x1xf32> to vector<32x256xf32>
    %67 = arith.mulf %63, %66 : vector<32x256xf32>
    %68 = arith.addf %58, %67 : vector<32x256xf32>
    %c240_i32 = arith.constant 240 : i32
    %69 = tpu.dynamic_rotate %1 by %c240_i32 dim 1 : vector<32x256xf32>, i32 -> vector<32x256xf32>
    %c7 = arith.constant 7 : index
    %c0_36 = arith.constant 0 : index
    %c0_37 = arith.constant 0 : index
    %70 = vector.load %arg3[%c7, %c0_36, %c0_37] : memref<18x1x256xf32, #tpu.memory_space<vmem>>, vector<1x1x256xf32>
    %71 = vector.shape_cast %70 : vector<1x1x256xf32> to vector<1x256xf32>
    %72 = vector.broadcast %71 : vector<1x256xf32> to vector<32x256xf32>
    %73 = arith.mulf %69, %72 : vector<32x256xf32>
    %c7_38 = arith.constant 7 : index
    %c0_39 = arith.constant 0 : index
    %c0_40 = arith.constant 0 : index
    %74 = vector.load %arg2[%c7_38, %c0_39, %c0_40] : memref<18x32x1xf32, #tpu.memory_space<vmem>>, vector<1x32x1xf32>
    %75 = vector.shape_cast %74 : vector<1x32x1xf32> to vector<32x1xf32>
    %76 = vector.broadcast %75 : vector<32x1xf32> to vector<32x256xf32>
    %77 = arith.mulf %73, %76 : vector<32x256xf32>
    %78 = arith.addf %68, %77 : vector<32x256xf32>
    %c239_i32 = arith.constant 239 : i32
    %79 = tpu.dynamic_rotate %1 by %c239_i32 dim 1 : vector<32x256xf32>, i32 -> vector<32x256xf32>
    %c8 = arith.constant 8 : index
    %c0_41 = arith.constant 0 : index
    %c0_42 = arith.constant 0 : index
    %80 = vector.load %arg3[%c8, %c0_41, %c0_42] : memref<18x1x256xf32, #tpu.memory_space<vmem>>, vector<1x1x256xf32>
    %81 = vector.shape_cast %80 : vector<1x1x256xf32> to vector<1x256xf32>
    %82 = vector.broadcast %81 : vector<1x256xf32> to vector<32x256xf32>
    %83 = arith.mulf %79, %82 : vector<32x256xf32>
    %c8_43 = arith.constant 8 : index
    %c0_44 = arith.constant 0 : index
    %c0_45 = arith.constant 0 : index
    %84 = vector.load %arg2[%c8_43, %c0_44, %c0_45] : memref<18x32x1xf32, #tpu.memory_space<vmem>>, vector<1x32x1xf32>
    %85 = vector.shape_cast %84 : vector<1x32x1xf32> to vector<32x1xf32>
    %86 = vector.broadcast %85 : vector<32x1xf32> to vector<32x256xf32>
    %87 = arith.mulf %83, %86 : vector<32x256xf32>
    %88 = arith.addf %78, %87 : vector<32x256xf32>
    %c0_46 = arith.constant 0 : index
    %c0_47 = arith.constant 0 : index
    %c0_48 = arith.constant 0 : index
    %89 = vector.load %arg4[%c0_46, %c0_47, %c0_48] : memref<2x32x1xf32, #tpu.memory_space<vmem>>, vector<1x32x1xf32>
    %90 = vector.shape_cast %89 : vector<1x32x1xf32> to vector<32x1xf32>
    %91 = vector.broadcast %90 : vector<32x1xf32> to vector<32x256xf32>
    %92 = arith.addf %88, %91 : vector<32x256xf32>
    %cst_49 = arith.constant 0.000000e+00 : f32
    %93 = vector.broadcast %cst_49 : f32 to vector<32x256xf32>
    %94 = arith.maximumf %92, %93 : vector<32x256xf32>
    %c0_50 = arith.constant 0 : index
    %c0_51 = arith.constant 0 : index
    %c0_52 = arith.constant 0 : index
    %95 = vector.load %arg9[%c0_50, %c0_51, %c0_52] : memref<2x32x256xf32, #tpu.memory_space<vmem>>, vector<1x32x256xf32>
    %96 = vector.shape_cast %95 : vector<1x32x256xf32> to vector<32x256xf32>
    %97 = vector.shape_cast %94 : vector<32x256xf32> to vector<1x32x256xf32>
    tpu.vector_store %arg9[%c0_50, %c0_51, %c0_52], %97 {strides = array<i32>} : memref<2x32x256xf32, #tpu.memory_space<vmem>>, vector<1x32x256xf32>,
    %cst_53 = arith.constant dense<0.000000e+00> : vector<32xf32>
    %98 = vector.multi_reduction <add>, %94, %cst_53 [1] : vector<32x256xf32> to vector<32xf32>
    %99 = vector.shape_cast %98 : vector<32xf32> to vector<32x1xf32>
    %100 = arith.addf %2, %99 : vector<32x1xf32>
    %cst_54 = arith.constant 0.000000e+00 : f32
    %101 = vector.broadcast %cst_54 : f32 to vector<32x256xf32>
    %c34_i32 = arith.constant 34 : i32
    %102 = tpu.dynamic_rotate %1 by %c34_i32 dim 1 : vector<32x256xf32>, i32 -> vector<32x256xf32>
    %c9 = arith.constant 9 : index
    %c0_55 = arith.constant 0 : index
    %c0_56 = arith.constant 0 : index
    %103 = vector.load %arg3[%c9, %c0_55, %c0_56] : memref<18x1x256xf32, #tpu.memory_space<vmem>>, vector<1x1x256xf32>
    %104 = vector.shape_cast %103 : vector<1x1x256xf32> to vector<1x256xf32>
    %105 = vector.broadcast %104 : vector<1x256xf32> to vector<32x256xf32>
    %106 = arith.mulf %102, %105 : vector<32x256xf32>
    %c9_57 = arith.constant 9 : index
    %c0_58 = arith.constant 0 : index
    %c0_59 = arith.constant 0 : index
    %107 = vector.load %arg2[%c9_57, %c0_58, %c0_59] : memref<18x32x1xf32, #tpu.memory_space<vmem>>, vector<1x32x1xf32>
    %108 = vector.shape_cast %107 : vector<1x32x1xf32> to vector<32x1xf32>
    %109 = vector.broadcast %108 : vector<32x1xf32> to vector<32x256xf32>
    %110 = arith.mulf %106, %109 : vector<32x256xf32>
    %111 = arith.addf %101, %110 : vector<32x256xf32>
    %c32_i32 = arith.constant 32 : i32
    %112 = tpu.dynamic_rotate %1 by %c32_i32 dim 1 : vector<32x256xf32>, i32 -> vector<32x256xf32>
    %c10 = arith.constant 10 : index
    %c0_60 = arith.constant 0 : index
    %c0_61 = arith.constant 0 : index
    %113 = vector.load %arg3[%c10, %c0_60, %c0_61] : memref<18x1x256xf32, #tpu.memory_space<vmem>>, vector<1x1x256xf32>
    %114 = vector.shape_cast %113 : vector<1x1x256xf32> to vector<1x256xf32>
    %115 = vector.broadcast %114 : vector<1x256xf32> to vector<32x256xf32>
    %116 = arith.mulf %112, %115 : vector<32x256xf32>
    %c10_62 = arith.constant 10 : index
    %c0_63 = arith.constant 0 : index
    %c0_64 = arith.constant 0 : index
    %117 = vector.load %arg2[%c10_62, %c0_63, %c0_64] : memref<18x32x1xf32, #tpu.memory_space<vmem>>, vector<1x32x1xf32>
    %118 = vector.shape_cast %117 : vector<1x32x1xf32> to vector<32x1xf32>
    %119 = vector.broadcast %118 : vector<32x1xf32> to vector<32x256xf32>
    %120 = arith.mulf %116, %119 : vector<32x256xf32>
    %121 = arith.addf %111, %120 : vector<32x256xf32>
    %c30_i32 = arith.constant 30 : i32
    %122 = tpu.dynamic_rotate %1 by %c30_i32 dim 1 : vector<32x256xf32>, i32 -> vector<32x256xf32>
    %c11 = arith.constant 11 : index
    %c0_65 = arith.constant 0 : index
    %c0_66 = arith.constant 0 : index
    %123 = vector.load %arg3[%c11, %c0_65, %c0_66] : memref<18x1x256xf32, #tpu.memory_space<vmem>>, vector<1x1x256xf32>
    %124 = vector.shape_cast %123 : vector<1x1x256xf32> to vector<1x256xf32>
    %125 = vector.broadcast %124 : vector<1x256xf32> to vector<32x256xf32>
    %126 = arith.mulf %122, %125 : vector<32x256xf32>
    %c11_67 = arith.constant 11 : index
    %c0_68 = arith.constant 0 : index
    %c0_69 = arith.constant 0 : index
    %127 = vector.load %arg2[%c11_67, %c0_68, %c0_69] : memref<18x32x1xf32, #tpu.memory_space<vmem>>, vector<1x32x1xf32>
    %128 = vector.shape_cast %127 : vector<1x32x1xf32> to vector<32x1xf32>
    %129 = vector.broadcast %128 : vector<32x1xf32> to vector<32x256xf32>
    %130 = arith.mulf %126, %129 : vector<32x256xf32>
    %131 = arith.addf %121, %130 : vector<32x256xf32>
    %c2_i32 = arith.constant 2 : i32
    %132 = tpu.dynamic_rotate %1 by %c2_i32 dim 1 : vector<32x256xf32>, i32 -> vector<32x256xf32>
    %c12 = arith.constant 12 : index
    %c0_70 = arith.constant 0 : index
    %c0_71 = arith.constant 0 : index
    %133 = vector.load %arg3[%c12, %c0_70, %c0_71] : memref<18x1x256xf32, #tpu.memory_space<vmem>>, vector<1x1x256xf32>
    %134 = vector.shape_cast %133 : vector<1x1x256xf32> to vector<1x256xf32>
    %135 = vector.broadcast %134 : vector<1x256xf32> to vector<32x256xf32>
    %136 = arith.mulf %132, %135 : vector<32x256xf32>
    %c12_72 = arith.constant 12 : index
    %c0_73 = arith.constant 0 : index
    %c0_74 = arith.constant 0 : index
    %137 = vector.load %arg2[%c12_72, %c0_73, %c0_74] : memref<18x32x1xf32, #tpu.memory_space<vmem>>, vector<1x32x1xf32>
    %138 = vector.shape_cast %137 : vector<1x32x1xf32> to vector<32x1xf32>
    %139 = vector.broadcast %138 : vector<32x1xf32> to vector<32x256xf32>
    %140 = arith.mulf %136, %139 : vector<32x256xf32>
    %141 = arith.addf %131, %140 : vector<32x256xf32>
    %c13 = arith.constant 13 : index
    %c0_75 = arith.constant 0 : index
    %c0_76 = arith.constant 0 : index
    %142 = vector.load %arg2[%c13, %c0_75, %c0_76] : memref<18x32x1xf32, #tpu.memory_space<vmem>>, vector<1x32x1xf32>
    %143 = vector.shape_cast %142 : vector<1x32x1xf32> to vector<32x1xf32>
    %144 = vector.broadcast %143 : vector<32x1xf32> to vector<32x256xf32>
    %145 = arith.mulf %1, %144 : vector<32x256xf32>
    %146 = arith.addf %141, %145 : vector<32x256xf32>
    %c254_i32 = arith.constant 254 : i32
    %147 = tpu.dynamic_rotate %1 by %c254_i32 dim 1 : vector<32x256xf32>, i32 -> vector<32x256xf32>
    %c14 = arith.constant 14 : index
    %c0_77 = arith.constant 0 : index
    %c0_78 = arith.constant 0 : index
    %148 = vector.load %arg3[%c14, %c0_77, %c0_78] : memref<18x1x256xf32, #tpu.memory_space<vmem>>, vector<1x1x256xf32>
    %149 = vector.shape_cast %148 : vector<1x1x256xf32> to vector<1x256xf32>
    %150 = vector.broadcast %149 : vector<1x256xf32> to vector<32x256xf32>
    %151 = arith.mulf %147, %150 : vector<32x256xf32>
    %c14_79 = arith.constant 14 : index
    %c0_80 = arith.constant 0 : index
    %c0_81 = arith.constant 0 : index
    %152 = vector.load %arg2[%c14_79, %c0_80, %c0_81] : memref<18x32x1xf32, #tpu.memory_space<vmem>>, vector<1x32x1xf32>
    %153 = vector.shape_cast %152 : vector<1x32x1xf32> to vector<32x1xf32>
    %154 = vector.broadcast %153 : vector<32x1xf32> to vector<32x256xf32>
    %155 = arith.mulf %151, %154 : vector<32x256xf32>
    %156 = arith.addf %146, %155 : vector<32x256xf32>
    %c226_i32 = arith.constant 226 : i32
    %157 = tpu.dynamic_rotate %1 by %c226_i32 dim 1 : vector<32x256xf32>, i32 -> vector<32x256xf32>
    %c15 = arith.constant 15 : index
    %c0_82 = arith.constant 0 : index
    %c0_83 = arith.constant 0 : index
    %158 = vector.load %arg3[%c15, %c0_82, %c0_83] : memref<18x1x256xf32, #tpu.memory_space<vmem>>, vector<1x1x256xf32>
    %159 = vector.shape_cast %158 : vector<1x1x256xf32> to vector<1x256xf32>
    %160 = vector.broadcast %159 : vector<1x256xf32> to vector<32x256xf32>
    %161 = arith.mulf %157, %160 : vector<32x256xf32>
    %c15_84 = arith.constant 15 : index
    %c0_85 = arith.constant 0 : index
    %c0_86 = arith.constant 0 : index
    %162 = vector.load %arg2[%c15_84, %c0_85, %c0_86] : memref<18x32x1xf32, #tpu.memory_space<vmem>>, vector<1x32x1xf32>
    %163 = vector.shape_cast %162 : vector<1x32x1xf32> to vector<32x1xf32>
    %164 = vector.broadcast %163 : vector<32x1xf32> to vector<32x256xf32>
    %165 = arith.mulf %161, %164 : vector<32x256xf32>
    %166 = arith.addf %156, %165 : vector<32x256xf32>
    %c224_i32 = arith.constant 224 : i32
    %167 = tpu.dynamic_rotate %1 by %c224_i32 dim 1 : vector<32x256xf32>, i32 -> vector<32x256xf32>
    %c16 = arith.constant 16 : index
    %c0_87 = arith.constant 0 : index
    %c0_88 = arith.constant 0 : index
    %168 = vector.load %arg3[%c16, %c0_87, %c0_88] : memref<18x1x256xf32, #tpu.memory_space<vmem>>, vector<1x1x256xf32>
    %169 = vector.shape_cast %168 : vector<1x1x256xf32> to vector<1x256xf32>
    %170 = vector.broadcast %169 : vector<1x256xf32> to vector<32x256xf32>
    %171 = arith.mulf %167, %170 : vector<32x256xf32>
    %c16_89 = arith.constant 16 : index
    %c0_90 = arith.constant 0 : index
    %c0_91 = arith.constant 0 : index
    %172 = vector.load %arg2[%c16_89, %c0_90, %c0_91] : memref<18x32x1xf32, #tpu.memory_space<vmem>>, vector<1x32x1xf32>
    %173 = vector.shape_cast %172 : vector<1x32x1xf32> to vector<32x1xf32>
    %174 = vector.broadcast %173 : vector<32x1xf32> to vector<32x256xf32>
    %175 = arith.mulf %171, %174 : vector<32x256xf32>
    %176 = arith.addf %166, %175 : vector<32x256xf32>
    %c222_i32 = arith.constant 222 : i32
    %177 = tpu.dynamic_rotate %1 by %c222_i32 dim 1 : vector<32x256xf32>, i32 -> vector<32x256xf32>
    %c17 = arith.constant 17 : index
    %c0_92 = arith.constant 0 : index
    %c0_93 = arith.constant 0 : index
    %178 = vector.load %arg3[%c17, %c0_92, %c0_93] : memref<18x1x256xf32, #tpu.memory_space<vmem>>, vector<1x1x256xf32>
    %179 = vector.shape_cast %178 : vector<1x1x256xf32> to vector<1x256xf32>
    %180 = vector.broadcast %179 : vector<1x256xf32> to vector<32x256xf32>
    %181 = arith.mulf %177, %180 : vector<32x256xf32>
    %c17_94 = arith.constant 17 : index
    %c0_95 = arith.constant 0 : index
    %c0_96 = arith.constant 0 : index
    %182 = vector.load %arg2[%c17_94, %c0_95, %c0_96] : memref<18x32x1xf32, #tpu.memory_space<vmem>>, vector<1x32x1xf32>
    %183 = vector.shape_cast %182 : vector<1x32x1xf32> to vector<32x1xf32>
    %184 = vector.broadcast %183 : vector<32x1xf32> to vector<32x256xf32>
    %185 = arith.mulf %181, %184 : vector<32x256xf32>
    %186 = arith.addf %176, %185 : vector<32x256xf32>
    %c1_97 = arith.constant 1 : index
    %c0_98 = arith.constant 0 : index
    %c0_99 = arith.constant 0 : index
    %187 = vector.load %arg4[%c1_97, %c0_98, %c0_99] : memref<2x32x1xf32, #tpu.memory_space<vmem>>, vector<1x32x1xf32>
    %188 = vector.shape_cast %187 : vector<1x32x1xf32> to vector<32x1xf32>
    %189 = vector.broadcast %188 : vector<32x1xf32> to vector<32x256xf32>
    %190 = arith.addf %186, %189 : vector<32x256xf32>
    %cst_100 = arith.constant 0.000000e+00 : f32
    %191 = vector.broadcast %cst_100 : f32 to vector<32x256xf32>
    %192 = arith.maximumf %190, %191 : vector<32x256xf32>
    %c1_101 = arith.constant 1 : index
    %c0_102 = arith.constant 0 : index
    %c0_103 = arith.constant 0 : index
    %193 = vector.load %arg9[%c1_101, %c0_102, %c0_103] : memref<2x32x256xf32, #tpu.memory_space<vmem>>, vector<1x32x256xf32>
    %194 = vector.shape_cast %193 : vector<1x32x256xf32> to vector<32x256xf32>
    %195 = vector.shape_cast %192 : vector<32x256xf32> to vector<1x32x256xf32>
    tpu.vector_store %arg9[%c1_101, %c0_102, %c0_103], %195 {strides = array<i32>} : memref<2x32x256xf32, #tpu.memory_space<vmem>>, vector<1x32x256xf32>,
    %cst_104 = arith.constant dense<0.000000e+00> : vector<32xf32>
    %196 = vector.multi_reduction <add>, %192, %cst_104 [1] : vector<32x256xf32> to vector<32xf32>
    %197 = vector.shape_cast %196 : vector<32xf32> to vector<32x1xf32>
    %198 = arith.addf %100, %197 : vector<32x1xf32>
    %cst_105 = arith.constant 3.906250e-03 : f32
    %199 = vector.broadcast %cst_105 : f32 to vector<32x1xf32>
    %200 = arith.mulf %198, %199 : vector<32x1xf32>
    %c0_106 = arith.constant 0 : index
    %c0_107 = arith.constant 0 : index
    %201 = vector.load %arg5[%c0_106, %c0_107] : memref<32x32xf32, #tpu.memory_space<vmem>>, vector<32x32xf32>
    %202 = vector.broadcast %200 : vector<32x1xf32> to vector<32x32xf32>
    %203 = arith.mulf %201, %202 : vector<32x32xf32>
    %cst_108 = arith.constant dense<0.000000e+00> : vector<32xf32>
    %204 = vector.multi_reduction <add>, %203, %cst_108 [0] : vector<32x32xf32> to vector<32xf32>
    %205 = vector.shape_cast %204 : vector<32xf32> to vector<1x32xf32>
    %c0_109 = arith.constant 0 : index
    %c0_110 = arith.constant 0 : index
    %206 = vector.load %arg6[%c0_109, %c0_110] : memref<1x32xf32, #tpu.memory_space<vmem>>, vector<1x32xf32>
    %207 = arith.addf %205, %206 : vector<1x32xf32>
    %cst_111 = arith.constant 0.000000e+00 : f32
    %208 = vector.broadcast %cst_111 : f32 to vector<1x32xf32>
    %209 = arith.maximumf %207, %208 : vector<1x32xf32>
    %c0_112 = arith.constant 0 : index
    %c0_113 = arith.constant 0 : index
    %c0_114 = arith.constant 0 : index
    %210 = vector.load %arg7[%c0_112, %c0_113, %c0_114] : memref<2x32x32xf32, #tpu.memory_space<vmem>>, vector<1x32x32xf32>
    %211 = vector.shape_cast %210 : vector<1x32x32xf32> to vector<32x32xf32>
    %212 = vector.broadcast %209 : vector<1x32xf32> to vector<32x32xf32>
    %213 = arith.mulf %211, %212 : vector<32x32xf32>
    %cst_115 = arith.constant dense<0.000000e+00> : vector<32xf32>
    %214 = vector.multi_reduction <add>, %213, %cst_115 [1] : vector<32x32xf32> to vector<32xf32>
    %215 = vector.shape_cast %214 : vector<32xf32> to vector<32x1xf32>
    %c1_116 = arith.constant 1 : index
    %c0_117 = arith.constant 0 : index
    %c0_118 = arith.constant 0 : index
    %216 = vector.load %arg7[%c1_116, %c0_117, %c0_118] : memref<2x32x32xf32, #tpu.memory_space<vmem>>, vector<1x32x32xf32>
    %217 = vector.shape_cast %216 : vector<1x32x32xf32> to vector<32x32xf32>
    %218 = vector.broadcast %209 : vector<1x32xf32> to vector<32x32xf32>
    %219 = arith.mulf %217, %218 : vector<32x32xf32>
    %cst_119 = arith.constant dense<0.000000e+00> : vector<32xf32>
    %220 = vector.multi_reduction <add>, %219, %cst_119 [1] : vector<32x32xf32> to vector<32xf32>
    %221 = vector.shape_cast %220 : vector<32xf32> to vector<32x1xf32>
    %222 = arith.maximumf %215, %221 : vector<32x1xf32>
    %223 = arith.subf %215, %222 : vector<32x1xf32>
    %224 = math.exp %223 : vector<32x1xf32>
    %225 = arith.subf %221, %222 : vector<32x1xf32>
    %226 = math.exp %225 : vector<32x1xf32>
    %227 = arith.addf %224, %226 : vector<32x1xf32>
    %228 = tpu.reciprocal %227 {approx = true} : vector<32x1xf32> -> vector<32x1xf32>
    %c0_120 = arith.constant 0 : index
    %c0_121 = arith.constant 0 : index
    %c0_122 = arith.constant 0 : index
    %229 = vector.load %arg9[%c0_120, %c0_121, %c0_122] : memref<2x32x256xf32, #tpu.memory_space<vmem>>, vector<1x32x256xf32>
    %230 = vector.shape_cast %229 : vector<1x32x256xf32> to vector<32x256xf32>
    %231 = arith.mulf %224, %228 : vector<32x1xf32>
    %232 = vector.broadcast %231 : vector<32x1xf32> to vector<32x256xf32>
    %233 = arith.mulf %230, %232 : vector<32x256xf32>
    %c1_123 = arith.constant 1 : index
    %c0_124 = arith.constant 0 : index
    %c0_125 = arith.constant 0 : index
    %234 = vector.load %arg9[%c1_123, %c0_124, %c0_125] : memref<2x32x256xf32, #tpu.memory_space<vmem>>, vector<1x32x256xf32>
    %235 = vector.shape_cast %234 : vector<1x32x256xf32> to vector<32x256xf32>
    %236 = arith.mulf %226, %228 : vector<32x1xf32>
    %237 = vector.broadcast %236 : vector<32x1xf32> to vector<32x256xf32>
    %238 = arith.mulf %235, %237 : vector<32x256xf32>
    %239 = arith.addf %233, %238 : vector<32x256xf32>
    %c0_126 = arith.constant 0 : index
    %c0_127 = arith.constant 0 : index
    %c0_128 = arith.constant 0 : index
    %240 = vector.load %arg8[%c0_126, %c0_127, %c0_128] : memref<1x32x256xf32, #tpu.memory_space<vmem>>, vector<1x32x256xf32>
    %241 = vector.shape_cast %240 : vector<1x32x256xf32> to vector<32x256xf32>
    %242 = vector.shape_cast %239 : vector<32x256xf32> to vector<1x32x256xf32>
    tpu.vector_store %arg8[%c0_126, %c0_127, %c0_128], %242 {strides = array<i32>} : memref<1x32x256xf32, #tpu.memory_space<vmem>>, vector<1x32x256xf32>,
    return
  }
  func.func @transform_0(%arg0: i32) -> (i32, i32, i32) {
    %c0_i32 = arith.constant 0 : i32
    %c0_i32_0 = arith.constant 0 : i32
    %c0_i32_1 = arith.constant 0 : i32
    return %arg0, %c0_i32, %c0_i32_0 : i32, i32, i32
  }
  func.func @transform_1(%arg0: i32) -> (i32, i32, i32) {
    %c0_i32 = arith.constant 0 : i32
    %c0_i32_0 = arith.constant 0 : i32
    %c0_i32_1 = arith.constant 0 : i32
    %c0_i32_2 = arith.constant 0 : i32
    return %c0_i32, %c0_i32_0, %c0_i32_1 : i32, i32, i32
  }
  func.func @transform_2(%arg0: i32) -> (i32, i32, i32) {
    %c0_i32 = arith.constant 0 : i32
    %c0_i32_0 = arith.constant 0 : i32
    %c0_i32_1 = arith.constant 0 : i32
    %c0_i32_2 = arith.constant 0 : i32
    return %c0_i32, %c0_i32_0, %c0_i32_1 : i32, i32, i32
  }
  func.func @transform_3(%arg0: i32) -> (i32, i32, i32) {
    %c0_i32 = arith.constant 0 : i32
    %c0_i32_0 = arith.constant 0 : i32
    %c0_i32_1 = arith.constant 0 : i32
    %c0_i32_2 = arith.constant 0 : i32
    return %c0_i32, %c0_i32_0, %c0_i32_1 : i32, i32, i32
  }
  func.func @transform_4(%arg0: i32) -> (i32, i32) {
    %c0_i32 = arith.constant 0 : i32
    %c0_i32_0 = arith.constant 0 : i32
    %c0_i32_1 = arith.constant 0 : i32
    return %c0_i32, %c0_i32_0 : i32, i32
  }
  func.func @transform_5(%arg0: i32) -> (i32, i32) {
    %c0_i32 = arith.constant 0 : i32
    %c0_i32_0 = arith.constant 0 : i32
    %c0_i32_1 = arith.constant 0 : i32
    return %c0_i32, %c0_i32_0 : i32, i32
  }
  func.func @transform_6(%arg0: i32) -> (i32, i32, i32) {
    %c0_i32 = arith.constant 0 : i32
    %c0_i32_0 = arith.constant 0 : i32
    %c0_i32_1 = arith.constant 0 : i32
    %c0_i32_2 = arith.constant 0 : i32
    return %c0_i32, %c0_i32_0, %c0_i32_1 : i32, i32, i32
  }
  func.func @transform_7(%arg0: i32) -> (i32, i32, i32) {
    %c0_i32 = arith.constant 0 : i32
    %c0_i32_0 = arith.constant 0 : i32
    %c0_i32_1 = arith.constant 0 : i32
    return %arg0, %c0_i32, %c0_i32_0 : i32, i32, i32
  }
}

</mosaic_0001>

<llo_original>
// kernel: sknet_pallas.1
$region0: #{sknet_pallas.1}
  #allocation0 [shape = 'u32[]', space=smem, size = 0x4, offset = 0x4, fixed_abs, tag = 'smem constant byte address 0x4 - core index']
  #allocation1 [shape = 'u32[144,128]{1,0:T(1,128)}', space=vmem, size = 0x12000, scoped, tag = 'internal scratch']
  #allocation2 [shape = 'f32[2,32,256]{2,1,0:T(8,128)}', space=vmem, size = 0x10000, scoped, tag = 'scratch operand']
  %s0 = inlined_call_operand.vmem [shape: f32[2,32,256], index: 0, kind: input, shape index: {}]
  %s1 = inlined_call_operand.vmem [shape: f32[18,32,1], index: 1, kind: input, shape index: {}]
  %s2 = inlined_call_operand.vmem [shape: f32[18,1,256], index: 2, kind: input, shape index: {}]
  %s3 = inlined_call_operand.vmem [shape: f32[2,32,1], index: 3, kind: input, shape index: {}]
  %s4 = inlined_call_operand.vmem [shape: f32[32,32], index: 4, kind: input, shape index: {}]
  %s5 = inlined_call_operand.vmem [shape: f32[1,32], index: 5, kind: input, shape index: {}]
  %s6 = inlined_call_operand.vmem [shape: f32[2,32,32], index: 6, kind: input, shape index: {}]
  %s7 = inlined_call_operand.vmem [shape: f32[2,32,256], index: 7, kind: output, shape index: {}]
  %s8 = sld [smem:[#allocation0]]
  $region61: #{sknet_pallas.1} parent=0
    _
  %s10 = ssub.s32 1, %s8
  %s11 = scalar_select 0, %s10, %s8
  loop: start=0, step=1, limit=4
  $region2: #{sknet_pallas.1} parent=0 // loop_pre_header
    _
  $region3: #{sknet_pallas.1} parent=0 // loop_header
    %s13 = sphi 0, %s17
    %p14 = scmp.ge.s32.totalorder %s13, 4
    %s23 = sphi 0, %s25
    %s26 = sphi 0, %s23
    %s27 = sphi 0, %s26
    %s43 = sphi 0, %s27
    %s47 = sphi 0, %s47
    %s49 = sphi 0, %s47
    %s50 = sphi 0, %s49
    %s64 = sphi 0, %s50
    %s68 = sphi 0, %s68
    %s70 = sphi 0, %s68
    %s71 = sphi 0, %s70
    %s85 = sphi 0, %s71
    %s89 = sphi 0, %s89
    %s91 = sphi 0, %s89
    %s92 = sphi 0, %s91
    %s106 = sphi 0, %s92
    %s110 = sphi 0, %s110
    %s112 = sphi 0, %s110
    %s113 = sphi 0, %s112
    %s127 = sphi 0, %s113
    %s131 = sphi 0, %s131
    %s133 = sphi 0, %s131
    %s134 = sphi 0, %s133
    %s148 = sphi 0, %s134
    %s152 = sphi 0, %s152
    %s154 = sphi 0, %s152
    %s155 = sphi 0, %s154
    %s169 = sphi 0, %s155
    %s175 = sphi 0, %s177
    %s178 = sphi 0, %s175
    %s179 = sphi 0, %s178
    %s195 = sphi 0, %s179
  $region4: #{sknet_pallas.1} parent=0 // loop_header_branch
    %16 = sbr.rel (%p14) target = $region8
  $region5: #{sknet_pallas.1} parent=0 // loop_body
    %s18 = ssub.s32 %s13, 1
    %s19 = ssub.s32 %s13, 2
    %s20 = sadd.s32 %s13, 1
    %s21 = ssub.s32 %s13, %s20
    %p22 = scmp.eq.s32.totalorder %s21, 0
    %s24 = sadd.s32 %s23, 1
    %s25 = scalar_select %p22, %s23, %s24
    %p28 = pneg %p22
    %p29 = scmp.eq.s32.totalorder %s13, 1
    %p30 = por %p28, %p29
    %p31 = scmp.ne.s32.totalorder %s23, %s26
    %p32 = scmp.eq.s32.totalorder %s13, 0
    %p33 = por %p31, %p32
    %p34 = scmp.ne.s32.totalorder %s23, %s26
    %p35 = scmp.eq.s32.totalorder %s18, 1
    %p36 = por %p34, %p35
    %p37 = scmp.ne.s32.totalorder %s26, %s27
    %p38 = scmp.eq.s32.totalorder %s18, 0
    %p39 = por %p37, %p38
    %p40 = scmp.ne.s32.totalorder %s26, %s27
    %p41 = scmp.eq.s32.totalorder %s19, 1
    %p42 = por %p40, %p41
    %p44 = scmp.ne.s32.totalorder %s27, %s43
    %p45 = scmp.eq.s32.totalorder %s19, 0
    %p46 = por %p44, %p45
    %s48 = sadd.s32 %s47, 1
    %p51 = scmp.eq.s32.totalorder %s13, 1
    %p52 = scmp.ne.s32.totalorder %s47, %s49
    %p53 = scmp.eq.s32.totalorder %s13, 0
    %p54 = por %p52, %p53
    %p55 = scmp.ne.s32.totalorder %s47, %s49
    %p56 = scmp.eq.s32.totalorder %s18, 1
    %p57 = por %p55, %p56
    %p58 = scmp.ne.s32.totalorder %s49, %s50
    %p59 = scmp.eq.s32.totalorder %s18, 0
    %p60 = por %p58, %p59
    %p61 = scmp.ne.s32.totalorder %s49, %s50
    %p62 = scmp.eq.s32.totalorder %s19, 1
    %p63 = por %p61, %p62
    %p65 = scmp.ne.s32.totalorder %s50, %s64
    %p66 = scmp.eq.s32.totalorder %s19, 0
    %p67 = por %p65, %p66
    %s69 = sadd.s32 %s68, 1
    %p72 = scmp.eq.s32.totalorder %s13, 1
    %p73 = scmp.ne.s32.totalorder %s68, %s70
    %p74 = scmp.eq.s32.totalorder %s13, 0
    %p75 = por %p73, %p74
    %p76 = scmp.ne.s32.totalorder %s68, %s70
    %p77 = scmp.eq.s32.totalorder %s18, 1
    %p78 = por %p76, %p77
    %p79 = scmp.ne.s32.totalorder %s70, %s71
    %p80 = scmp.eq.s32.totalorder %s18, 0
    %p81 = por %p79, %p80
    %p82 = scmp.ne.s32.totalorder %s70, %s71
    %p83 = scmp.eq.s32.totalorder %s19, 1
    %p84 = por %p82, %p83
    %p86 = scmp.ne.s32.totalorder %s71, %s85
    %p87 = scmp.eq.s32.totalorder %s19, 0
    %p88 = por %p86, %p87
    %s90 = sadd.s32 %s89, 1
    %p93 = scmp.eq.s32.totalorder %s13, 1
    %p94 = scmp.ne.s32.totalorder %s89, %s91
    %p95 = scmp.eq.s32.totalorder %s13, 0
    %p96 = por %p94, %p95
    %p97 = scmp.ne.s32.totalorder %s89, %s91
    %p98 = scmp.eq.s32.totalorder %s18, 1
    %p99 = por %p97, %p98
    %p100 = scmp.ne.s32.totalorder %s91, %s92
    %p101 = scmp.eq.s32.totalorder %s18, 0
    %p102 = por %p100, %p101
    %p103 = scmp.ne.s32.totalorder %s91, %s92
    %p104 = scmp.eq.s32.totalorder %s19, 1
    %p105 = por %p103, %p104
    %p107 = scmp.ne.s32.totalorder %s92, %s106
    %p108 = scmp.eq.s32.totalorder %s19, 0
    %p109 = por %p107, %p108
    %s111 = sadd.s32 %s110, 1
    %p114 = scmp.eq.s32.totalorder %s13, 1
    %p115 = scmp.ne.s32.totalorder %s110, %s112
    %p116 = scmp.eq.s32.totalorder %s13, 0
    %p117 = por %p115, %p116
    %p118 = scmp.ne.s32.totalorder %s110, %s112
    %p119 = scmp.eq.s32.totalorder %s18, 1
    %p120 = por %p118, %p119
    %p121 = scmp.ne.s32.totalorder %s112, %s113
    %p122 = scmp.eq.s32.totalorder %s18, 0
    %p123 = por %p121, %p122
    %p124 = scmp.ne.s32.totalorder %s112, %s113
    %p125 = scmp.eq.s32.totalorder %s19, 1
    %p126 = por %p124, %p125
    %p128 = scmp.ne.s32.totalorder %s113, %s127
    %p129 = scmp.eq.s32.totalorder %s19, 0
    %p130 = por %p128, %p129
    %s132 = sadd.s32 %s131, 1
    %p135 = scmp.eq.s32.totalorder %s13, 1
    %p136 = scmp.ne.s32.totalorder %s131, %s133
    %p137 = scmp.eq.s32.totalorder %s13, 0
    %p138 = por %p136, %p137
    %p139 = scmp.ne.s32.totalorder %s131, %s133
    %p140 = scmp.eq.s32.totalorder %s18, 1
    %p141 = por %p139, %p140
    %p142 = scmp.ne.s32.totalorder %s133, %s134
    %p143 = scmp.eq.s32.totalorder %s18, 0
    %p144 = por %p142, %p143
    %p145 = scmp.ne.s32.totalorder %s133, %s134
    %p146 = scmp.eq.s32.totalorder %s19, 1
    %p147 = por %p145, %p146
    %p149 = scmp.ne.s32.totalorder %s134, %s148
    %p150 = scmp.eq.s32.totalorder %s19, 0
    %p151 = por %p149, %p150
    %s153 = sadd.s32 %s152, 1
    %p156 = scmp.eq.s32.totalorder %s13, 1
    %p157 = scmp.ne.s32.totalorder %s152, %s154
    %p158 = scmp.eq.s32.totalorder %s13, 0
    %p159 = por %p157, %p158
    %p160 = scmp.ne.s32.totalorder %s152, %s154
    %p161 = scmp.eq.s32.totalorder %s18, 1
    %p162 = por %p160, %p161
    %p163 = scmp.ne.s32.totalorder %s154, %s155
    %p164 = scmp.eq.s32.totalorder %s18, 0
    %p165 = por %p163, %p164
    %p166 = scmp.ne.s32.totalorder %s154, %s155
    %p167 = scmp.eq.s32.totalorder %s19, 1
    %p168 = por %p166, %p167
    %p170 = scmp.ne.s32.totalorder %s155, %s169
    %p171 = scmp.eq.s32.totalorder %s19, 0
    %p172 = por %p170, %p171
    %s173 = ssub.s32 %s13, %s20
    %p174 = scmp.eq.s32.totalorder %s173, 0
    %s176 = sadd.s32 %s175, 1
    %s177 = scalar_select %p174, %s175, %s176
    %p180 = pneg %p174
    %p181 = scmp.eq.s32.totalorder %s13, 1
    %p182 = por %p180, %p181
    %p183 = scmp.ne.s32.totalorder %s175, %s178
    %p184 = scmp.eq.s32.totalorder %s13, 0
    %p185 = por %p183, %p184
    %p186 = scmp.ne.s32.totalorder %s175, %s178
    %p187 = scmp.eq.s32.totalorder %s18, 1
    %p188 = por %p186, %p187
    %p189 = scmp.ne.s32.totalorder %s178, %s179
    %p190 = scmp.eq.s32.totalorder %s18, 0
    %p191 = por %p189, %p190
    %p192 = scmp.ne.s32.totalorder %s178, %s179
    %p193 = scmp.eq.s32.totalorder %s19, 1
    %p194 = por %p192, %p193
    %p196 = scmp.ne.s32.totalorder %s179, %s195
    %p197 = scmp.eq.s32.totalorder %s19, 0
    %p198 = por %p196, %p197
    %p199 = scmp.le.s32.totalorder 1, %s13
    %p200 = scmp.lt.s32.totalorder %s13, 3
    %p201 = pnand %p199, %p200
    %p202 = pneg %p201
    // Predicated region
    $region9: #{sknet_pallas.1} parent=5 // pred_check
      _
    $region10: #{sknet_pallas.1} parent=5 // pred_check_branch
      %204 = sbr.rel (%p201) target = $region12
    $region11: #{sknet_pallas.1} parent=5 // pred_region
      %s205 = ssub.s32 %s13, 1
      // Predicated region
      $region13: #{sknet_pallas.1} parent=11 // pred_check
        %p206 = pneg %p60
      $region14: #{sknet_pallas.1} parent=11 // pred_check_branch
        %208 = sbr.rel (%p206) target = $region16
      $region15: #{sknet_pallas.1} parent=11 // pred_region
        _
      $region16: #{sknet_pallas.1} parent=11 // pred_fallthru
        _
      // Predicated region
      $region17: #{sknet_pallas.1} parent=11 // pred_check
        %p209 = pneg %p81
      $region18: #{sknet_pallas.1} parent=11 // pred_check_branch
        %211 = sbr.rel (%p209) target = $region20
      $region19: #{sknet_pallas.1} parent=11 // pred_region
        _
      $region20: #{sknet_pallas.1} parent=11 // pred_fallthru
        _
      // Predicated region
      $region21: #{sknet_pallas.1} parent=11 // pred_check
        %p212 = pneg %p102
      $region22: #{sknet_pallas.1} parent=11 // pred_check_branch
        %214 = sbr.rel (%p212) target = $region24
      $region23: #{sknet_pallas.1} parent=11 // pred_region
        _
      $region24: #{sknet_pallas.1} parent=11 // pred_fallthru
        _
      // Predicated region
      $region25: #{sknet_pallas.1} parent=11 // pred_check
        %p215 = pneg %p123
      $region26: #{sknet_pallas.1} parent=11 // pred_check_branch
        %217 = sbr.rel (%p215) target = $region28
      $region27: #{sknet_pallas.1} parent=11 // pred_region
        _
      $region28: #{sknet_pallas.1} parent=11 // pred_fallthru
        _
      // Predicated region
      $region29: #{sknet_pallas.1} parent=11 // pred_check
        %p218 = pneg %p144
      $region30: #{sknet_pallas.1} parent=11 // pred_check_branch
        %220 = sbr.rel (%p218) target = $region32
      $region31: #{sknet_pallas.1} parent=11 // pred_region
        _
      $region32: #{sknet_pallas.1} parent=11 // pred_fallthru
        _
      // Predicated region
      $region33: #{sknet_pallas.1} parent=11 // pred_check
        %p221 = pneg %p165
      $region34: #{sknet_pallas.1} parent=11 // pred_check_branch
        %223 = sbr.rel (%p221) target = $region36
      $region35: #{sknet_pallas.1} parent=11 // pred_region
        _
      $region36: #{sknet_pallas.1} parent=11 // pred_fallthru
        _
    $region12: #{sknet_pallas.1} parent=5 // pred_fallthru
      _
    %p224 = scmp.lt.s32.totalorder %s13, 2
    // Predicated region
    $region37: #{sknet_pallas.1} parent=5 // pred_check
      %p225 = pneg %p224
    $region38: #{sknet_pallas.1} parent=5 // pred_check_branch
      %227 = sbr.rel (%p225) target = $region40
    $region39: #{sknet_pallas.1} parent=5 // pred_region
      // Predicated region
      $region41: #{sknet_pallas.1} parent=39 // pred_check
        %p228 = pneg %p33
      $region42: #{sknet_pallas.1} parent=39 // pred_check_branch
        %230 = sbr.rel (%p228) target = $region44
      $region43: #{sknet_pallas.1} parent=39 // pred_region
        %p231 = scmp.lt.s32.totalorder %s13, 1
        %s232 = scalar_select %p231, %s13, 1
        %s233 = smul.addr %s232, 8
        %s234 = smul.addr %s233, 8
        %s235 = scalar_lea.vmem %s0, %s234
      $region44: #{sknet_pallas.1} parent=39 // pred_fallthru
        _
    $region40: #{sknet_pallas.1} parent=5 // pred_fallthru
      _
    %p236 = scmp.le.s32.totalorder 1, %s13
    %p237 = scmp.lt.s32.totalorder %s13, 3
    %p238 = pnand %p236, %p237
    %p239 = pneg %p238
    // Predicated region
    $region45: #{sknet_pallas.1} parent=5 // pred_check
      _
    $region46: #{sknet_pallas.1} parent=5 // pred_check_branch
      %241 = sbr.rel (%p238) target = $region48
    $region47: #{sknet_pallas.1} parent=5 // pred_region
      %s242 = ssub.s32 %s13, 1
      %p243 = scmp.lt.s32.totalorder %s18, 1
      %s244 = scalar_select %p243, %s18, 1
      %s245 = smul.addr %s244, 8
      %s246 = smul.addr %s245, 8
      %s247 = scalar_lea.vmem %s0, %s246
      %p248 = pneg %p39
      %p249 = pneg %p36
      %p250 = pneg %p60
      %p251 = pneg %p57
      %p252 = pneg %p81
      %p253 = pneg %p78
      %p254 = pneg %p102
      %p255 = pneg %p99
      %p256 = pneg %p123
      %p257 = pneg %p120
      %p258 = pneg %p144
      %p259 = pneg %p141
      %p260 = pneg %p165
      %p261 = pneg %p162
      %p262 = pneg %p191
      %p263 = pneg %p188
      %p264 = scmp.lt.s32.totalorder %s18, 1
      %s265 = scalar_select %p264, %s18, 1
      %s266 = smul.addr %s265, 8
      %s267 = smul.addr %s266, 8
      %s268 = scalar_lea.vmem %s7, %s267
      %p269 = scmp.lt.s32.totalorder %s18, 1
      %s270 = scalar_select %p269, %s18, 1
      %s271 = smul.addr %s270, 8
      %s272 = smul.addr %s271, 8
      %s273 = scalar_lea.vmem %s0, %s272
      %p274 = scmp.lt.s32.totalorder %s18, 1
      %s275 = scalar_select %p274, %s18, 1
      %s276 = smul.addr %s275, 8
      %s277 = smul.addr %s276, 8
      %s278 = scalar_lea.vmem %s7, %s277
      %v279 = vld [vmem:[%s273] sm:$0xff]
      %v280 = vld [vmem:[%s273 + $0x8] sm:$0xff]
      %v281 = vld [vmem:[%s273 + $0x10] sm:$0xff]
      %v282 = vld [vmem:[%s273 + $0x18] sm:$0xff]
      %v283 = vld [vmem:[%s273 + $0x20] sm:$0xff]
      %v284 = vld [vmem:[%s273 + $0x28] sm:$0xff]
      %v285 = vld [vmem:[%s273 + $0x30] sm:$0xff]
      %v286 = vld [vmem:[%s273 + $0x38] sm:$0xff]
      %287 = vrot.lane.b32.xlu0 %v279, 17
      %v288 = vpop.permute.xlu0 %287
      %289 = vrot.lane.b32.xlu0 %v281, 17
      %v290 = vpop.permute.xlu0 %289
      %291 = vrot.lane.b32.xlu0 %v283, 17
      %v292 = vpop.permute.xlu0 %291
      %293 = vrot.lane.b32.xlu0 %v285, 17
      %v294 = vpop.permute.xlu0 %293
      %295 = vrot.lane.b32.xlu0 %v280, 17
      %v296 = vpop.permute.xlu0 %295
      %297 = vrot.lane.b32.xlu0 %v282, 17
      %v298 = vpop.permute.xlu0 %297
      %299 = vrot.lane.b32.xlu0 %v284, 17
      %v300 = vpop.permute.xlu0 %299
      %301 = vrot.lane.b32.xlu0 %v286, 17
      %v302 = vpop.permute.xlu0 %301
      %v303 = vlaneseq
      %v304 = vand.u32 %v303, 127
      %vm305 = vcmp.lt.s32.totalorder %v304, 17
      %v306 = vsel %vm305, %v288, %v296
      %v307 = vsel %vm305, %v290, %v298
      %v308 = vsel %vm305, %v292, %v300
      %v309 = vsel %vm305, %v294, %v302
      %v310 = vsel %vm305, %v296, %v288
      %v311 = vsel %vm305, %v298, %v290
      %v312 = vsel %vm305, %v300, %v292
      %v313 = vsel %vm305, %v302, %v294
      %v314 = vld [vmem:[%s2] sm:$0x3]
      %v316 = vlaneseq
      %v317 = vshrl.u32 %v316, 7
      %v318 = vsub.s32 0, %v317
      %v319 = vrot.slane %v314, %v318
      %v320 = vlaneseq
      %v321 = vshrl.u32 %v320, 7
      %v322 = vsub.s32 1, %v321
      %v323 = vrot.slane %v314, %v322
      %v326 = vmul.f32 %v310, %v319
      %v327 = vmul.f32 %v306, %v323
      %v328 = vmul.f32 %v311, %v319
      %v329 = vmul.f32 %v307, %v323
      %v330 = vmul.f32 %v312, %v319
      %v331 = vmul.f32 %v308, %v323
      %v332 = vmul.f32 %v313, %v319
      %v333 = vmul.f32 %v309, %v323
      %v334 = vld [vmem:[%s1] sm:$0xff]
      %v335 = vld [vmem:[%s1 + $0x8] sm:$0xff]
      %v336 = vld [vmem:[%s1 + $0x10] sm:$0xff]
      %v337 = vld [vmem:[%s1 + $0x18] sm:$0xff]
      %339 = vset.pattern.permute.xlu0 0
      %340 = vperm.xlu0 %339, %v334
      %v341 = vpop.permute.xlu0 %340
      %344 = vset.pattern.permute.xlu0 0
      %345 = vperm.xlu0 %344, %v335
      %v346 = vpop.permute.xlu0 %345
      %349 = vset.pattern.permute.xlu0 0
      %350 = vperm.xlu0 %349, %v336
      %v351 = vpop.permute.xlu0 %350
      %354 = vset.pattern.permute.xlu0 0
      %355 = vperm.xlu0 %354, %v337
      %v356 = vpop.permute.xlu0 %355
      %v358 = vmul.f32 %v326, %v341
      %v359 = vmul.f32 %v327, %v341
      %v360 = vmul.f32 %v328, %v346
      %v361 = vmul.f32 %v329, %v346
      %v362 = vmul.f32 %v330, %v351
      %v363 = vmul.f32 %v331, %v351
      %v364 = vmul.f32 %v332, %v356
      %v365 = vmul.f32 %v333, %v356
      %v366 = vadd.f32 %v358, 0.0
      %v367 = vadd.f32 %v359, 0.0
      %v368 = vadd.f32 %v360, 0.0
      %v369 = vadd.f32 %v361, 0.0
      %v370 = vadd.f32 %v362, 0.0
      %v371 = vadd.f32 %v363, 0.0
      %v372 = vadd.f32 %v364, 0.0
      %v373 = vadd.f32 %v365, 0.0
      %374 = vrot.lane.b32.xlu0 %v279, 16
      %v375 = vpop.permute.xlu0 %374
      %376 = vrot.lane.b32.xlu0 %v281, 16
      %v377 = vpop.permute.xlu0 %376
      %378 = vrot.lane.b32.xlu0 %v283, 16
      %v379 = vpop.permute.xlu0 %378
      %380 = vrot.lane.b32.xlu0 %v285, 16
      %v381 = vpop.permute.xlu0 %380
      %382 = vrot.lane.b32.xlu0 %v280, 16
      %v383 = vpop.permute.xlu0 %382
      %384 = vrot.lane.b32.xlu0 %v282, 16
      %v385 = vpop.permute.xlu0 %384
      %386 = vrot.lane.b32.xlu0 %v284, 16
      %v387 = vpop.permute.xlu0 %386
      %388 = vrot.lane.b32.xlu0 %v286, 16
      %v389 = vpop.permute.xlu0 %388
      %vm390 = vcmp.lt.s32.totalorder %v304, 16
      %v391 = vsel %vm390, %v375, %v383
      %v392 = vsel %vm390, %v377, %v385
      %v393 = vsel %vm390, %v379, %v387
      %v394 = vsel %vm390, %v381, %v389
      %v395 = vsel %vm390, %v383, %v375
      %v396 = vsel %vm390, %v385, %v377
      %v397 = vsel %vm390, %v387, %v379
      %v398 = vsel %vm390, %v389, %v381
      %s399 = scalar_lea.vmem %s2, 2
      %v400 = vld [vmem:[%s399] sm:$0x3]
      %v402 = vlaneseq
      %v403 = vshrl.u32 %v402, 7
      %v404 = vsub.s32 0, %v403
      %v405 = vrot.slane %v400, %v404
      %v406 = vlaneseq
      %v407 = vshrl.u32 %v406, 7
      %v408 = vsub.s32 1, %v407
      %v409 = vrot.slane %v400, %v408
      %v412 = vmul.f32 %v395, %v405
      %v413 = vmul.f32 %v391, %v409
      %v414 = vmul.f32 %v396, %v405
      %v415 = vmul.f32 %v392, %v409
      %v416 = vmul.f32 %v397, %v405
      %v417 = vmul.f32 %v393, %v409
      %v418 = vmul.f32 %v398, %v405
      %v419 = vmul.f32 %v394, %v409
      %s420 = scalar_lea.vmem %s1, 32
      %v421 = vld [vmem:[%s420] sm:$0xff]
      %v422 = vld [vmem:[%s420 + $0x8] sm:$0xff]
      %v423 = vld [vmem:[%s420 + $0x10] sm:$0xff]
      %v424 = vld [vmem:[%s420 + $0x18] sm:$0xff]
      %426 = vset.pattern.permute.xlu0 0
      %427 = vperm.xlu0 %426, %v421
      %v428 = vpop.permute.xlu0 %427
      %431 = vset.pattern.permute.xlu0 0
      %432 = vperm.xlu0 %431, %v422
      %v433 = vpop.permute.xlu0 %432
      %436 = vset.pattern.permute.xlu0 0
      %437 = vperm.xlu0 %436, %v423
      %v438 = vpop.permute.xlu0 %437
      %441 = vset.pattern.permute.xlu0 0
      %442 = vperm.xlu0 %441, %v424
      %v443 = vpop.permute.xlu0 %442
      %v445 = vmul.f32 %v412, %v428
      %v446 = vmul.f32 %v413, %v428
      %v447 = vmul.f32 %v414, %v433
      %v448 = vmul.f32 %v415, %v433
      %v449 = vmul.f32 %v416, %v438
      %v450 = vmul.f32 %v417, %v438
      %v451 = vmul.f32 %v418, %v443
      %v452 = vmul.f32 %v419, %v443
      %v453 = vadd.f32 %v366, %v445
      %v454 = vadd.f32 %v367, %v446
      %v455 = vadd.f32 %v368, %v447
      %v456 = vadd.f32 %v369, %v448
      %v457 = vadd.f32 %v370, %v449
      %v458 = vadd.f32 %v371, %v450
      %v459 = vadd.f32 %v372, %v451
      %v460 = vadd.f32 %v373, %v452
      %461 = vrot.lane.b32.xlu0 %v279, 15
      %v462 = vpop.permute.xlu0 %461
      %463 = vrot.lane.b32.xlu0 %v281, 15
      %v464 = vpop.permute.xlu0 %463
      %465 = vrot.lane.b32.xlu0 %v283, 15
      %v466 = vpop.permute.xlu0 %465
      %467 = vrot.lane.b32.xlu0 %v285, 15
      %v468 = vpop.permute.xlu0 %467
      %469 = vrot.lane.b32.xlu0 %v280, 15
      %v470 = vpop.permute.xlu0 %469
      %471 = vrot.lane.b32.xlu0 %v282, 15
      %v472 = vpop.permute.xlu0 %471
      %473 = vrot.lane.b32.xlu0 %v284, 15
      %v474 = vpop.permute.xlu0 %473
      %475 = vrot.lane.b32.xlu0 %v286, 15
      %v476 = vpop.permute.xlu0 %475
      %vm477 = vcmp.lt.s32.totalorder %v304, 15
      %v478 = vsel %vm477, %v462, %v470
      %v479 = vsel %vm477, %v464, %v472
      %v480 = vsel %vm477, %v466, %v474
      %v481 = vsel %vm477, %v468, %v476
      %v482 = vsel %vm477, %v470, %v462
      %v483 = vsel %vm477, %v472, %v464
      %v484 = vsel %vm477, %v474, %v466
      %v485 = vsel %vm477, %v476, %v468
      %s486 = scalar_lea.vmem %s2, 4
      %v487 = vld [vmem:[%s486] sm:$0x3]
      %v489 = vlaneseq
      %v490 = vshrl.u32 %v489, 7
      %v491 = vsub.s32 0, %v490
      %v492 = vrot.slane %v487, %v491
      %v493 = vlaneseq
      %v494 = vshrl.u32 %v493, 7
      %v495 = vsub.s32 1, %v494
      %v496 = vrot.slane %v487, %v495
      %v499 = vmul.f32 %v482, %v492
      %v500 = vmul.f32 %v478, %v496
      %v501 = vmul.f32 %v483, %v492
      %v502 = vmul.f32 %v479, %v496
      %v503 = vmul.f32 %v484, %v492
      %v504 = vmul.f32 %v480, %v496
      %v505 = vmul.f32 %v485, %v492
      %v506 = vmul.f32 %v481, %v496
      %s507 = scalar_lea.vmem %s1, 64
      %v508 = vld [vmem:[%s507] sm:$0xff]
      %v509 = vld [vmem:[%s507 + $0x8] sm:$0xff]
      %v510 = vld [vmem:[%s507 + $0x10] sm:$0xff]
      %v511 = vld [vmem:[%s507 + $0x18] sm:$0xff]
      %513 = vset.pattern.permute.xlu0 0
      %514 = vperm.xlu0 %513, %v508
      %v515 = vpop.permute.xlu0 %514
      %518 = vset.pattern.permute.xlu0 0
      %519 = vperm.xlu0 %518, %v509
      %v520 = vpop.permute.xlu0 %519
      %523 = vset.pattern.permute.xlu0 0
      %524 = vperm.xlu0 %523, %v510
      %v525 = vpop.permute.xlu0 %524
      %528 = vset.pattern.permute.xlu0 0
      %529 = vperm.xlu0 %528, %v511
      %v530 = vpop.permute.xlu0 %529
      %v532 = vmul.f32 %v499, %v515
      %v533 = vmul.f32 %v500, %v515
      %v534 = vmul.f32 %v501, %v520
      %v535 = vmul.f32 %v502, %v520
      %v536 = vmul.f32 %v503, %v525
      %v537 = vmul.f32 %v504, %v525
      %v538 = vmul.f32 %v505, %v530
      %v539 = vmul.f32 %v506, %v530
      %v540 = vadd.f32 %v453, %v532
      %v541 = vadd.f32 %v454, %v533
      %v542 = vadd.f32 %v455, %v534
      %v543 = vadd.f32 %v456, %v535
      %v544 = vadd.f32 %v457, %v536
      %v545 = vadd.f32 %v458, %v537
      %v546 = vadd.f32 %v459, %v538
      %v547 = vadd.f32 %v460, %v539
      %548 = vrot.lane.b32.xlu0 %v279, 1
      %v549 = vpop.permute.xlu0 %548
      %550 = vrot.lane.b32.xlu0 %v281, 1
      %v551 = vpop.permute.xlu0 %550
      %552 = vrot.lane.b32.xlu0 %v283, 1
      %v553 = vpop.permute.xlu0 %552
      %554 = vrot.lane.b32.xlu0 %v285, 1
      %v555 = vpop.permute.xlu0 %554
      %556 = vrot.lane.b32.xlu0 %v280, 1
      %v557 = vpop.permute.xlu0 %556
      %558 = vrot.lane.b32.xlu0 %v282, 1
      %v559 = vpop.permute.xlu0 %558
      %560 = vrot.lane.b32.xlu0 %v284, 1
      %v561 = vpop.permute.xlu0 %560
      %562 = vrot.lane.b32.xlu0 %v286, 1
      %v563 = vpop.permute.xlu0 %562
      %vm564 = vcmp.lt.s32.totalorder %v304, 1
      %v565 = vsel %vm564, %v549, %v557
      %v566 = vsel %vm564, %v551, %v559
      %v567 = vsel %vm564, %v553, %v561
      %v568 = vsel %vm564, %v555, %v563
      %v569 = vsel %vm564, %v557, %v549
      %v570 = vsel %vm564, %v559, %v551
      %v571 = vsel %vm564, %v561, %v553
      %v572 = vsel %vm564, %v563, %v555
      %s573 = scalar_lea.vmem %s2, 6
      %v574 = vld [vmem:[%s573] sm:$0x3]
      %v576 = vlaneseq
      %v577 = vshrl.u32 %v576, 7
      %v578 = vsub.s32 0, %v577
      %v579 = vrot.slane %v574, %v578
      %v580 = vlaneseq
      %v581 = vshrl.u32 %v580, 7
      %v582 = vsub.s32 1, %v581
      %v583 = vrot.slane %v574, %v582
      %v586 = vmul.f32 %v569, %v579
      %v587 = vmul.f32 %v565, %v583
      %v588 = vmul.f32 %v570, %v579
      %v589 = vmul.f32 %v566, %v583
      %v590 = vmul.f32 %v571, %v579
      %v591 = vmul.f32 %v567, %v583
      %v592 = vmul.f32 %v572, %v579
      %v593 = vmul.f32 %v568, %v583
      %s594 = scalar_lea.vmem %s1, 96
      %v595 = vld [vmem:[%s594] sm:$0xff]
      %v596 = vld [vmem:[%s594 + $0x8] sm:$0xff]
      %v597 = vld [vmem:[%s594 + $0x10] sm:$0xff]
      %v598 = vld [vmem:[%s594 + $0x18] sm:$0xff]
      %600 = vset.pattern.permute.xlu0 0
      %601 = vperm.xlu0 %600, %v595
      %v602 = vpop.permute.xlu0 %601
      %605 = vset.pattern.permute.xlu0 0
      %606 = vperm.xlu0 %605, %v596
      %v607 = vpop.permute.xlu0 %606
      %610 = vset.pattern.permute.xlu0 0
      %611 = vperm.xlu0 %610, %v597
      %v612 = vpop.permute.xlu0 %611
      %615 = vset.pattern.permute.xlu0 0
      %616 = vperm.xlu0 %615, %v598
      %v617 = vpop.permute.xlu0 %616
      %v619 = vmul.f32 %v586, %v602
      %v620 = vmul.f32 %v587, %v602
      %v621 = vmul.f32 %v588, %v607
      %v622 = vmul.f32 %v589, %v607
      %v623 = vmul.f32 %v590, %v612
      %v624 = vmul.f32 %v591, %v612
      %v625 = vmul.f32 %v592, %v617
      %v626 = vmul.f32 %v593, %v617
      %v627 = vadd.f32 %v540, %v619
      %v628 = vadd.f32 %v541, %v620
      %v629 = vadd.f32 %v542, %v621
      %v630 = vadd.f32 %v543, %v622
      %v631 = vadd.f32 %v544, %v623
      %v632 = vadd.f32 %v545, %v624
      %v633 = vadd.f32 %v546, %v625
      %v634 = vadd.f32 %v547, %v626
      %s635 = scalar_lea.vmem %s1, 128
      %v636 = vld [vmem:[%s635] sm:$0xff]
      %v637 = vld [vmem:[%s635 + $0x8] sm:$0xff]
      %v638 = vld [vmem:[%s635 + $0x10] sm:$0xff]
      %v639 = vld [vmem:[%s635 + $0x18] sm:$0xff]
      %641 = vset.pattern.permute.xlu0 0
      %642 = vperm.xlu0 %641, %v636
      %v643 = vpop.permute.xlu0 %642
      %646 = vset.pattern.permute.xlu0 0
      %647 = vperm.xlu0 %646, %v637
      %v648 = vpop.permute.xlu0 %647
      %651 = vset.pattern.permute.xlu0 0
      %652 = vperm.xlu0 %651, %v638
      %v653 = vpop.permute.xlu0 %652
      %656 = vset.pattern.permute.xlu0 0
      %657 = vperm.xlu0 %656, %v639
      %v658 = vpop.permute.xlu0 %657
      %v660 = vmul.f32 %v279, %v643
      %v661 = vmul.f32 %v280, %v643
      %v662 = vmul.f32 %v281, %v648
      %v663 = vmul.f32 %v282, %v648
      %v664 = vmul.f32 %v283, %v653
      %v665 = vmul.f32 %v284, %v653
      %v666 = vmul.f32 %v285, %v658
      %v667 = vmul.f32 %v286, %v658
      %v668 = vadd.f32 %v627, %v660
      %v669 = vadd.f32 %v628, %v661
      %v670 = vadd.f32 %v629, %v662
      %v671 = vadd.f32 %v630, %v663
      %v672 = vadd.f32 %v631, %v664
      %v673 = vadd.f32 %v632, %v665
      %v674 = vadd.f32 %v633, %v666
      %v675 = vadd.f32 %v634, %v667
      %676 = vrot.lane.b32.xlu0 %v279, 127
      %v677 = vpop.permute.xlu0 %676
      %678 = vrot.lane.b32.xlu0 %v281, 127
      %v679 = vpop.permute.xlu0 %678
      %680 = vrot.lane.b32.xlu0 %v283, 127
      %v681 = vpop.permute.xlu0 %680
      %682 = vrot.lane.b32.xlu0 %v285, 127
      %v683 = vpop.permute.xlu0 %682
      %684 = vrot.lane.b32.xlu0 %v280, 127
      %v685 = vpop.permute.xlu0 %684
      %686 = vrot.lane.b32.xlu0 %v282, 127
      %v687 = vpop.permute.xlu0 %686
      %688 = vrot.lane.b32.xlu0 %v284, 127
      %v689 = vpop.permute.xlu0 %688
      %690 = vrot.lane.b32.xlu0 %v286, 127
      %v691 = vpop.permute.xlu0 %690
      %vm692 = vcmp.lt.s32.totalorder %v304, 127
      %v693 = vsel %vm692, %v677, %v685
      %v694 = vsel %vm692, %v679, %v687
      %v695 = vsel %vm692, %v681, %v689
      %v696 = vsel %vm692, %v683, %v691
      %v697 = vsel %vm692, %v685, %v677
      %v698 = vsel %vm692, %v687, %v679
      %v699 = vsel %vm692, %v689, %v681
      %v700 = vsel %vm692, %v691, %v683
      %s701 = scalar_lea.vmem %s2, 10
      %v702 = vld [vmem:[%s701] sm:$0x3]
      %v704 = vlaneseq
      %v705 = vshrl.u32 %v704, 7
      %v706 = vsub.s32 0, %v705
      %v707 = vrot.slane %v702, %v706
      %v708 = vlaneseq
      %v709 = vshrl.u32 %v708, 7
      %v710 = vsub.s32 1, %v709
      %v711 = vrot.slane %v702, %v710
      %v714 = vmul.f32 %v693, %v707
      %v715 = vmul.f32 %v697, %v711
      %v716 = vmul.f32 %v694, %v707
      %v717 = vmul.f32 %v698, %v711
      %v718 = vmul.f32 %v695, %v707
      %v719 = vmul.f32 %v699, %v711
      %v720 = vmul.f32 %v696, %v707
      %v721 = vmul.f32 %v700, %v711
      %s722 = scalar_lea.vmem %s1, 160
      %v723 = vld [vmem:[%s722] sm:$0xff]
      %v724 = vld [vmem:[%s722 + $0x8] sm:$0xff]
      %v725 = vld [vmem:[%s722 + $0x10] sm:$0xff]
      %v726 = vld [vmem:[%s722 + $0x18] sm:$0xff]
      %728 = vset.pattern.permute.xlu0 0
      %729 = vperm.xlu0 %728, %v723
      %v730 = vpop.permute.xlu0 %729
      %733 = vset.pattern.permute.xlu0 0
      %734 = vperm.xlu0 %733, %v724
      %v735 = vpop.permute.xlu0 %734
      %738 = vset.pattern.permute.xlu0 0
      %739 = vperm.xlu0 %738, %v725
      %v740 = vpop.permute.xlu0 %739
      %743 = vset.pattern.permute.xlu0 0
      %744 = vperm.xlu0 %743, %v726
      %v745 = vpop.permute.xlu0 %744
      %v747 = vmul.f32 %v714, %v730
      %v748 = vmul.f32 %v715, %v730
      %v749 = vmul.f32 %v716, %v735
      %v750 = vmul.f32 %v717, %v735
      %v751 = vmul.f32 %v718, %v740
      %v752 = vmul.f32 %v719, %v740
      %v753 = vmul.f32 %v720, %v745
      %v754 = vmul.f32 %v721, %v745
      %v755 = vadd.f32 %v668, %v747
      %v756 = vadd.f32 %v669, %v748
      %v757 = vadd.f32 %v670, %v749
      %v758 = vadd.f32 %v671, %v750
      %v759 = vadd.f32 %v672, %v751
      %v760 = vadd.f32 %v673, %v752
      %v761 = vadd.f32 %v674, %v753
      %v762 = vadd.f32 %v675, %v754
      %763 = vrot.lane.b32.xlu0 %v279, 113
      %v764 = vpop.permute.xlu0 %763
      %765 = vrot.lane.b32.xlu0 %v281, 113
      %v766 = vpop.permute.xlu0 %765
      %767 = vrot.lane.b32.xlu0 %v283, 113
      %v768 = vpop.permute.xlu0 %767
      %769 = vrot.lane.b32.xlu0 %v285, 113
      %v770 = vpop.permute.xlu0 %769
      %771 = vrot.lane.b32.xlu0 %v280, 113
      %v772 = vpop.permute.xlu0 %771
      %773 = vrot.lane.b32.xlu0 %v282, 113
      %v774 = vpop.permute.xlu0 %773
      %775 = vrot.lane.b32.xlu0 %v284, 113
      %v776 = vpop.permute.xlu0 %775
      %777 = vrot.lane.b32.xlu0 %v286, 113
      %v778 = vpop.permute.xlu0 %777
      %vm779 = vcmp.lt.s32.totalorder %v304, 113
      %v780 = vsel %vm779, %v764, %v772
      %v781 = vsel %vm779, %v766, %v774
      %v782 = vsel %vm779, %v768, %v776
      %v783 = vsel %vm779, %v770, %v778
      %v784 = vsel %vm779, %v772, %v764
      %v785 = vsel %vm779, %v774, %v766
      %v786 = vsel %vm779, %v776, %v768
      %v787 = vsel %vm779, %v778, %v770
      %s788 = scalar_lea.vmem %s2, 12
      %v789 = vld [vmem:[%s788] sm:$0x3]
      %v791 = vlaneseq
      %v792 = vshrl.u32 %v791, 7
      %v793 = vsub.s32 0, %v792
      %v794 = vrot.slane %v789, %v793
      %v795 = vlaneseq
      %v796 = vshrl.u32 %v795, 7
      %v797 = vsub.s32 1, %v796
      %v798 = vrot.slane %v789, %v797
      %v801 = vmul.f32 %v780, %v794
      %v802 = vmul.f32 %v784, %v798
      %v803 = vmul.f32 %v781, %v794
      %v804 = vmul.f32 %v785, %v798
      %v805 = vmul.f32 %v782, %v794
      %v806 = vmul.f32 %v786, %v798
      %v807 = vmul.f32 %v783, %v794
      %v808 = vmul.f32 %v787, %v798
      %s809 = scalar_lea.vmem %s1, 192
      %v810 = vld [vmem:[%s809] sm:$0xff]
      %v811 = vld [vmem:[%s809 + $0x8] sm:$0xff]
      %v812 = vld [vmem:[%s809 + $0x10] sm:$0xff]
      %v813 = vld [vmem:[%s809 + $0x18] sm:$0xff]
      %815 = vset.pattern.permute.xlu0 0
      %816 = vperm.xlu0 %815, %v810
      %v817 = vpop.permute.xlu0 %816
      %820 = vset.pattern.permute.xlu0 0
      %821 = vperm.xlu0 %820, %v811
      %v822 = vpop.permute.xlu0 %821
      %825 = vset.pattern.permute.xlu0 0
      %826 = vperm.xlu0 %825, %v812
      %v827 = vpop.permute.xlu0 %826
      %830 = vset.pattern.permute.xlu0 0
      %831 = vperm.xlu0 %830, %v813
      %v832 = vpop.permute.xlu0 %831
      %v834 = vmul.f32 %v801, %v817
      %v835 = vmul.f32 %v802, %v817
      %v836 = vmul.f32 %v803, %v822
      %v837 = vmul.f32 %v804, %v822
      %v838 = vmul.f32 %v805, %v827
      %v839 = vmul.f32 %v806, %v827
      %v840 = vmul.f32 %v807, %v832
      %v841 = vmul.f32 %v808, %v832
      %v842 = vadd.f32 %v755, %v834
      %v843 = vadd.f32 %v756, %v835
      %v844 = vadd.f32 %v757, %v836
      %v845 = vadd.f32 %v758, %v837
      %v846 = vadd.f32 %v759, %v838
      %v847 = vadd.f32 %v760, %v839
      %v848 = vadd.f32 %v761, %v840
      %v849 = vadd.f32 %v762, %v841
      %850 = vrot.lane.b32.xlu0 %v279, 112
      %v851 = vpop.permute.xlu0 %850
      %852 = vrot.lane.b32.xlu0 %v281, 112
      %v853 = vpop.permute.xlu0 %852
      %854 = vrot.lane.b32.xlu0 %v283, 112
      %v855 = vpop.permute.xlu0 %854
      %856 = vrot.lane.b32.xlu0 %v285, 112
      %v857 = vpop.permute.xlu0 %856
      %858 = vrot.lane.b32.xlu0 %v280, 112
      %v859 = vpop.permute.xlu0 %858
      %860 = vrot.lane.b32.xlu0 %v282, 112
      %v861 = vpop.permute.xlu0 %860
      %862 = vrot.lane.b32.xlu0 %v284, 112
      %v863 = vpop.permute.xlu0 %862
      %864 = vrot.lane.b32.xlu0 %v286, 112
      %v865 = vpop.permute.xlu0 %864
      %vm866 = vcmp.lt.s32.totalorder %v304, 112
      %v867 = vsel %vm866, %v851, %v859
      %v868 = vsel %vm866, %v853, %v861
      %v869 = vsel %vm866, %v855, %v863
      %v870 = vsel %vm866, %v857, %v865
      %v871 = vsel %vm866, %v859, %v851
      %v872 = vsel %vm866, %v861, %v853
      %v873 = vsel %vm866, %v863, %v855
      %v874 = vsel %vm866, %v865, %v857
      %s875 = scalar_lea.vmem %s2, 14
      %v876 = vld [vmem:[%s875] sm:$0x3]
      %v878 = vlaneseq
      %v879 = vshrl.u32 %v878, 7
      %v880 = vsub.s32 0, %v879
      %v881 = vrot.slane %v876, %v880
      %v882 = vlaneseq
      %v883 = vshrl.u32 %v882, 7
      %v884 = vsub.s32 1, %v883
      %v885 = vrot.slane %v876, %v884
      %v888 = vmul.f32 %v867, %v881
      %v889 = vmul.f32 %v871, %v885
      %v890 = vmul.f32 %v868, %v881
      %v891 = vmul.f32 %v872, %v885
      %v892 = vmul.f32 %v869, %v881
      %v893 = vmul.f32 %v873, %v885
      %v894 = vmul.f32 %v870, %v881
      %v895 = vmul.f32 %v874, %v885
      %s896 = scalar_lea.vmem %s1, 224
      %v897 = vld [vmem:[%s896] sm:$0xff]
      %v898 = vld [vmem:[%s896 + $0x8] sm:$0xff]
      %v899 = vld [vmem:[%s896 + $0x10] sm:$0xff]
      %v900 = vld [vmem:[%s896 + $0x18] sm:$0xff]
      %902 = vset.pattern.permute.xlu0 0
      %903 = vperm.xlu0 %902, %v897
      %v904 = vpop.permute.xlu0 %903
      %907 = vset.pattern.permute.xlu0 0
      %908 = vperm.xlu0 %907, %v898
      %v909 = vpop.permute.xlu0 %908
      %912 = vset.pattern.permute.xlu0 0
      %913 = vperm.xlu0 %912, %v899
      %v914 = vpop.permute.xlu0 %913
      %917 = vset.pattern.permute.xlu0 0
      %918 = vperm.xlu0 %917, %v900
      %v919 = vpop.permute.xlu0 %918
      %v921 = vmul.f32 %v888, %v904
      %v922 = vmul.f32 %v889, %v904
      %v923 = vmul.f32 %v890, %v909
      %v924 = vmul.f32 %v891, %v909
      %v925 = vmul.f32 %v892, %v914
      %v926 = vmul.f32 %v893, %v914
      %v927 = vmul.f32 %v894, %v919
      %v928 = vmul.f32 %v895, %v919
      %v929 = vadd.f32 %v842, %v921
      %v930 = vadd.f32 %v843, %v922
      %v931 = vadd.f32 %v844, %v923
      %v932 = vadd.f32 %v845, %v924
      %v933 = vadd.f32 %v846, %v925
      %v934 = vadd.f32 %v847, %v926
      %v935 = vadd.f32 %v848, %v927
      %v936 = vadd.f32 %v849, %v928
      %937 = vrot.lane.b32.xlu0 %v279, 111
      %v938 = vpop.permute.xlu0 %937
      %939 = vrot.lane.b32.xlu0 %v281, 111
      %v940 = vpop.permute.xlu0 %939
      %941 = vrot.lane.b32.xlu0 %v283, 111
      %v942 = vpop.permute.xlu0 %941
      %943 = vrot.lane.b32.xlu0 %v285, 111
      %v944 = vpop.permute.xlu0 %943
      %945 = vrot.lane.b32.xlu0 %v280, 111
      %v946 = vpop.permute.xlu0 %945
      %947 = vrot.lane.b32.xlu0 %v282, 111
      %v948 = vpop.permute.xlu0 %947
      %949 = vrot.lane.b32.xlu0 %v284, 111
      %v950 = vpop.permute.xlu0 %949
      %951 = vrot.lane.b32.xlu0 %v286, 111
      %v952 = vpop.permute.xlu0 %951
      %vm953 = vcmp.lt.s32.totalorder %v304, 111
      %v954 = vsel %vm953, %v938, %v946
      %v955 = vsel %vm953, %v940, %v948
      %v956 = vsel %vm953, %v942, %v950
      %v957 = vsel %vm953, %v944, %v952
      %v958 = vsel %vm953, %v946, %v938
      %v959 = vsel %vm953, %v948, %v940
      %v960 = vsel %vm953, %v950, %v942
      %v961 = vsel %vm953, %v952, %v944
      %s962 = scalar_lea.vmem %s2, 16
      %v963 = vld [vmem:[%s962] sm:$0x3]
      %v965 = vlaneseq
      %v966 = vshrl.u32 %v965, 7
      %v967 = vsub.s32 0, %v966
      %v968 = vrot.slane %v963, %v967
      %v969 = vlaneseq
      %v970 = vshrl.u32 %v969, 7
      %v971 = vsub.s32 1, %v970
      %v972 = vrot.slane %v963, %v971
      %v975 = vmul.f32 %v954, %v968
      %v976 = vmul.f32 %v958, %v972
      %v977 = vmul.f32 %v955, %v968
      %v978 = vmul.f32 %v959, %v972
      %v979 = vmul.f32 %v956, %v968
      %v980 = vmul.f32 %v960, %v972
      %v981 = vmul.f32 %v957, %v968
      %v982 = vmul.f32 %v961, %v972
      %s983 = scalar_lea.vmem %s1, 256
      %v984 = vld [vmem:[%s983] sm:$0xff]
      %v985 = vld [vmem:[%s983 + $0x8] sm:$0xff]
      %v986 = vld [vmem:[%s983 + $0x10] sm:$0xff]
      %v987 = vld [vmem:[%s983 + $0x18] sm:$0xff]
      %989 = vset.pattern.permute.xlu0 0
      %990 = vperm.xlu0 %989, %v984
      %v991 = vpop.permute.xlu0 %990
      %994 = vset.pattern.permute.xlu0 0
      %995 = vperm.xlu0 %994, %v985
      %v996 = vpop.permute.xlu0 %995
      %999 = vset.pattern.permute.xlu0 0
      %1000 = vperm.xlu0 %999, %v986
      %v1001 = vpop.permute.xlu0 %1000
      %1004 = vset.pattern.permute.xlu0 0
      %1005 = vperm.xlu0 %1004, %v987
      %v1006 = vpop.permute.xlu0 %1005
      %v1008 = vmul.f32 %v975, %v991
      %v1009 = vmul.f32 %v976, %v991
      %v1010 = vmul.f32 %v977, %v996
      %v1011 = vmul.f32 %v978, %v996
      %v1012 = vmul.f32 %v979, %v1001
      %v1013 = vmul.f32 %v980, %v1001
      %v1014 = vmul.f32 %v981, %v1006
      %v1015 = vmul.f32 %v982, %v1006
      %v1016 = vadd.f32 %v929, %v1008
      %v1017 = vadd.f32 %v930, %v1009
      %v1018 = vadd.f32 %v931, %v1010
      %v1019 = vadd.f32 %v932, %v1011
      %v1020 = vadd.f32 %v933, %v1012
      %v1021 = vadd.f32 %v934, %v1013
      %v1022 = vadd.f32 %v935, %v1014
      %v1023 = vadd.f32 %v936, %v1015
      %v1024 = vld [vmem:[%s3] sm:$0xff]
      %v1025 = vld [vmem:[%s3 + $0x8] sm:$0xff]
      %v1026 = vld [vmem:[%s3 + $0x10] sm:$0xff]
      %v1027 = vld [vmem:[%s3 + $0x18] sm:$0xff]
      %1029 = vset.pattern.permute.xlu0 0
      %1030 = vperm.xlu0 %1029, %v1024
      %v1031 = vpop.permute.xlu0 %1030
      %1034 = vset.pattern.permute.xlu0 0
      %1035 = vperm.xlu0 %1034, %v1025
      %v1036 = vpop.permute.xlu0 %1035
      %1039 = vset.pattern.permute.xlu0 0
      %1040 = vperm.xlu0 %1039, %v1026
      %v1041 = vpop.permute.xlu0 %1040
      %1044 = vset.pattern.permute.xlu0 0
      %1045 = vperm.xlu0 %1044, %v1027
      %v1046 = vpop.permute.xlu0 %1045
      %v1048 = vadd.f32 %v1016, %v1031
      %v1049 = vadd.f32 %v1017, %v1031
      %v1050 = vadd.f32 %v1018, %v1036
      %v1051 = vadd.f32 %v1019, %v1036
      %v1052 = vadd.f32 %v1020, %v1041
      %v1053 = vadd.f32 %v1021, %v1041
      %v1054 = vadd.f32 %v1022, %v1046
      %v1055 = vadd.f32 %v1023, %v1046
      %v1056 = vmax.f32 %v1048, 0.0
      %v1057 = vmax.f32 %v1049, 0.0
      %v1058 = vmax.f32 %v1050, 0.0
      %v1059 = vmax.f32 %v1051, 0.0
      %v1060 = vmax.f32 %v1052, 0.0
      %v1061 = vmax.f32 %v1053, 0.0
      %v1062 = vmax.f32 %v1054, 0.0
      %v1063 = vmax.f32 %v1055, 0.0
      %1064 = vst [vmem:[#allocation2] sm:$0xff] %v1056
      %1065 = vst [vmem:[#allocation2 + $0x8] sm:$0xff] %v1057
      %1066 = vst [vmem:[#allocation2 + $0x10] sm:$0xff] %v1058
      %1067 = vst [vmem:[#allocation2 + $0x18] sm:$0xff] %v1059
      %1068 = vst [vmem:[#allocation2 + $0x20] sm:$0xff] %v1060
      %1069 = vst [vmem:[#allocation2 + $0x28] sm:$0xff] %v1061
      %1070 = vst [vmem:[#allocation2 + $0x30] sm:$0xff] %v1062
      %1071 = vst [vmem:[#allocation2 + $0x38] sm:$0xff] %v1063
      %v1072 = vadd.f32 %v1056, %v1057
      %1073 = vadd.xlane.f32.xlu0 %v1072
      %v1074 = vpop.xlane.xlu0 %1073
      %v1075 = vadd.f32 %v1058, %v1059
      %1076 = vadd.xlane.f32.xlu0 %v1075
      %v1077 = vpop.xlane.xlu0 %1076
      %v1078 = vadd.f32 %v1060, %v1061
      %1079 = vadd.xlane.f32.xlu0 %v1078
      %v1080 = vpop.xlane.xlu0 %1079
      %v1081 = vadd.f32 %v1062, %v1063
      %1082 = vadd.xlane.f32.xlu0 %v1081
      %v1083 = vpop.xlane.xlu0 %1082
      %v1084 = vadd.f32 %v1074, 0.0
      %v1085 = vadd.f32 %v1077, 0.0
      %v1086 = vadd.f32 %v1080, 0.0
      %v1087 = vadd.f32 %v1083, 0.0
      %1088 = vrot.lane.b32.xlu0 %v279, 34
      %v1089 = vpop.permute.xlu0 %1088
      %1090 = vrot.lane.b32.xlu0 %v281, 34
      %v1091 = vpop.permute.xlu0 %1090
      %1092 = vrot.lane.b32.xlu0 %v283, 34
      %v1093 = vpop.permute.xlu0 %1092
      %1094 = vrot.lane.b32.xlu0 %v285, 34
      %v1095 = vpop.permute.xlu0 %1094
      %1096 = vrot.lane.b32.xlu0 %v280, 34
      %v1097 = vpop.permute.xlu0 %1096
      %1098 = vrot.lane.b32.xlu0 %v282, 34
      %v1099 = vpop.permute.xlu0 %1098
      %1100 = vrot.lane.b32.xlu0 %v284, 34
      %v1101 = vpop.permute.xlu0 %1100
      %1102 = vrot.lane.b32.xlu0 %v286, 34
      %v1103 = vpop.permute.xlu0 %1102
      %vm1104 = vcmp.lt.s32.totalorder %v304, 34
      %v1105 = vsel %vm1104, %v1089, %v1097
      %v1106 = vsel %vm1104, %v1091, %v1099
      %v1107 = vsel %vm1104, %v1093, %v1101
      %v1108 = vsel %vm1104, %v1095, %v1103
      %v1109 = vsel %vm1104, %v1097, %v1089
      %v1110 = vsel %vm1104, %v1099, %v1091
      %v1111 = vsel %vm1104, %v1101, %v1093
      %v1112 = vsel %vm1104, %v1103, %v1095
      %s1113 = scalar_lea.vmem %s2, 18
      %v1114 = vld [vmem:[%s1113] sm:$0x3]
      %v1116 = vlaneseq
      %v1117 = vshrl.u32 %v1116, 7
      %v1118 = vsub.s32 0, %v1117
      %v1119 = vrot.slane %v1114, %v1118
      %v1120 = vlaneseq
      %v1121 = vshrl.u32 %v1120, 7
      %v1122 = vsub.s32 1, %v1121
      %v1123 = vrot.slane %v1114, %v1122
      %v1126 = vmul.f32 %v1109, %v1119
      %v1127 = vmul.f32 %v1105, %v1123
      %v1128 = vmul.f32 %v1110, %v1119
      %v1129 = vmul.f32 %v1106, %v1123
      %v1130 = vmul.f32 %v1111, %v1119
      %v1131 = vmul.f32 %v1107, %v1123
      %v1132 = vmul.f32 %v1112, %v1119
      %v1133 = vmul.f32 %v1108, %v1123
      %s1134 = scalar_lea.vmem %s1, 288
      %v1135 = vld [vmem:[%s1134] sm:$0xff]
      %v1136 = vld [vmem:[%s1134 + $0x8] sm:$0xff]
      %v1137 = vld [vmem:[%s1134 + $0x10] sm:$0xff]
      %v1138 = vld [vmem:[%s1134 + $0x18] sm:$0xff]
      %1140 = vset.pattern.permute.xlu0 0
      %1141 = vperm.xlu0 %1140, %v1135
      %v1142 = vpop.permute.xlu0 %1141
      %1145 = vset.pattern.permute.xlu0 0
      %1146 = vperm.xlu0 %1145, %v1136
      %v1147 = vpop.permute.xlu0 %1146
      %1150 = vset.pattern.permute.xlu0 0
      %1151 = vperm.xlu0 %1150, %v1137
      %v1152 = vpop.permute.xlu0 %1151
      %1155 = vset.pattern.permute.xlu0 0
      %1156 = vperm.xlu0 %1155, %v1138
      %v1157 = vpop.permute.xlu0 %1156
      %v1159 = vmul.f32 %v1126, %v1142
      %v1160 = vmul.f32 %v1127, %v1142
      %v1161 = vmul.f32 %v1128, %v1147
      %v1162 = vmul.f32 %v1129, %v1147
      %v1163 = vmul.f32 %v1130, %v1152
      %v1164 = vmul.f32 %v1131, %v1152
      %v1165 = vmul.f32 %v1132, %v1157
      %v1166 = vmul.f32 %v1133, %v1157
      %v1167 = vadd.f32 %v1159, 0.0
      %v1168 = vadd.f32 %v1160, 0.0
      %v1169 = vadd.f32 %v1161, 0.0
      %v1170 = vadd.f32 %v1162, 0.0
      %v1171 = vadd.f32 %v1163, 0.0
      %v1172 = vadd.f32 %v1164, 0.0
      %v1173 = vadd.f32 %v1165, 0.0
      %v1174 = vadd.f32 %v1166, 0.0
      %1175 = vrot.lane.b32.xlu0 %v279, 32
      %v1176 = vpop.permute.xlu0 %1175
      %1177 = vrot.lane.b32.xlu0 %v281, 32
      %v1178 = vpop.permute.xlu0 %1177
      %1179 = vrot.lane.b32.xlu0 %v283, 32
      %v1180 = vpop.permute.xlu0 %1179
      %1181 = vrot.lane.b32.xlu0 %v285, 32
      %v1182 = vpop.permute.xlu0 %1181
      %1183 = vrot.lane.b32.xlu0 %v280, 32
      %v1184 = vpop.permute.xlu0 %1183
      %1185 = vrot.lane.b32.xlu0 %v282, 32
      %v1186 = vpop.permute.xlu0 %1185
      %1187 = vrot.lane.b32.xlu0 %v284, 32
      %v1188 = vpop.permute.xlu0 %1187
      %1189 = vrot.lane.b32.xlu0 %v286, 32
      %v1190 = vpop.permute.xlu0 %1189
      %vm1191 = vcmp.lt.s32.totalorder %v304, 32
      %v1192 = vsel %vm1191, %v1176, %v1184
      %v1193 = vsel %vm1191, %v1178, %v1186
      %v1194 = vsel %vm1191, %v1180, %v1188
      %v1195 = vsel %vm1191, %v1182, %v1190
      %v1196 = vsel %vm1191, %v1184, %v1176
      %v1197 = vsel %vm1191, %v1186, %v1178
      %v1198 = vsel %vm1191, %v1188, %v1180
      %v1199 = vsel %vm1191, %v1190, %v1182
      %s1200 = scalar_lea.vmem %s2, 20
      %v1201 = vld [vmem:[%s1200] sm:$0x3]
      %v1203 = vlaneseq
      %v1204 = vshrl.u32 %v1203, 7
      %v1205 = vsub.s32 0, %v1204
      %v1206 = vrot.slane %v1201, %v1205
      %v1207 = vlaneseq
      %v1208 = vshrl.u32 %v1207, 7
      %v1209 = vsub.s32 1, %v1208
      %v1210 = vrot.slane %v1201, %v1209
      %v1213 = vmul.f32 %v1196, %v1206
      %v1214 = vmul.f32 %v1192, %v1210
      %v1215 = vmul.f32 %v1197, %v1206
      %v1216 = vmul.f32 %v1193, %v1210
      %v1217 = vmul.f32 %v1198, %v1206
      %v1218 = vmul.f32 %v1194, %v1210
      %v1219 = vmul.f32 %v1199, %v1206
      %v1220 = vmul.f32 %v1195, %v1210
      %s1221 = scalar_lea.vmem %s1, 320
      %v1222 = vld [vmem:[%s1221] sm:$0xff]
      %v1223 = vld [vmem:[%s1221 + $0x8] sm:$0xff]
      %v1224 = vld [vmem:[%s1221 + $0x10] sm:$0xff]
      %v1225 = vld [vmem:[%s1221 + $0x18] sm:$0xff]
      %1227 = vset.pattern.permute.xlu0 0
      %1228 = vperm.xlu0 %1227, %v1222
      %v1229 = vpop.permute.xlu0 %1228
      %1232 = vset.pattern.permute.xlu0 0
      %1233 = vperm.xlu0 %1232, %v1223
      %v1234 = vpop.permute.xlu0 %1233
      %1237 = vset.pattern.permute.xlu0 0
      %1238 = vperm.xlu0 %1237, %v1224
      %v1239 = vpop.permute.xlu0 %1238
      %1242 = vset.pattern.permute.xlu0 0
      %1243 = vperm.xlu0 %1242, %v1225
      %v1244 = vpop.permute.xlu0 %1243
      %v1246 = vmul.f32 %v1213, %v1229
      %v1247 = vmul.f32 %v1214, %v1229
      %v1248 = vmul.f32 %v1215, %v1234
      %v1249 = vmul.f32 %v1216, %v1234
      %v1250 = vmul.f32 %v1217, %v1239
      %v1251 = vmul.f32 %v1218, %v1239
      %v1252 = vmul.f32 %v1219, %v1244
      %v1253 = vmul.f32 %v1220, %v1244
      %v1254 = vadd.f32 %v1167, %v1246
      %v1255 = vadd.f32 %v1168, %v1247
      %v1256 = vadd.f32 %v1169, %v1248
      %v1257 = vadd.f32 %v1170, %v1249
      %v1258 = vadd.f32 %v1171, %v1250
      %v1259 = vadd.f32 %v1172, %v1251
      %v1260 = vadd.f32 %v1173, %v1252
      %v1261 = vadd.f32 %v1174, %v1253
      %1262 = vrot.lane.b32.xlu0 %v279, 30
      %v1263 = vpop.permute.xlu0 %1262
      %1264 = vrot.lane.b32.xlu0 %v281, 30
      %v1265 = vpop.permute.xlu0 %1264
      %1266 = vrot.lane.b32.xlu0 %v283, 30
      %v1267 = vpop.permute.xlu0 %1266
      %1268 = vrot.lane.b32.xlu0 %v285, 30
      %v1269 = vpop.permute.xlu0 %1268
      %1270 = vrot.lane.b32.xlu0 %v280, 30
      %v1271 = vpop.permute.xlu0 %1270
      %1272 = vrot.lane.b32.xlu0 %v282, 30
      %v1273 = vpop.permute.xlu0 %1272
      %1274 = vrot.lane.b32.xlu0 %v284, 30
      %v1275 = vpop.permute.xlu0 %1274
      %1276 = vrot.lane.b32.xlu0 %v286, 30
      %v1277 = vpop.permute.xlu0 %1276
      %vm1278 = vcmp.lt.s32.totalorder %v304, 30
      %v1279 = vsel %vm1278, %v1263, %v1271
      %v1280 = vsel %vm1278, %v1265, %v1273
      %v1281 = vsel %vm1278, %v1267, %v1275
      %v1282 = vsel %vm1278, %v1269, %v1277
      %v1283 = vsel %vm1278, %v1271, %v1263
      %v1284 = vsel %vm1278, %v1273, %v1265
      %v1285 = vsel %vm1278, %v1275, %v1267
      %v1286 = vsel %vm1278, %v1277, %v1269
      %s1287 = scalar_lea.vmem %s2, 22
      %v1288 = vld [vmem:[%s1287] sm:$0x3]
      %v1290 = vlaneseq
      %v1291 = vshrl.u32 %v1290, 7
      %v1292 = vsub.s32 0, %v1291
      %v1293 = vrot.slane %v1288, %v1292
      %v1294 = vlaneseq
      %v1295 = vshrl.u32 %v1294, 7
      %v1296 = vsub.s32 1, %v1295
      %v1297 = vrot.slane %v1288, %v1296
      %v1300 = vmul.f32 %v1283, %v1293
      %v1301 = vmul.f32 %v1279, %v1297
      %v1302 = vmul.f32 %v1284, %v1293
      %v1303 = vmul.f32 %v1280, %v1297
      %v1304 = vmul.f32 %v1285, %v1293
      %v1305 = vmul.f32 %v1281, %v1297
      %v1306 = vmul.f32 %v1286, %v1293
      %v1307 = vmul.f32 %v1282, %v1297
      %s1308 = scalar_lea.vmem %s1, 352
      %v1309 = vld [vmem:[%s1308] sm:$0xff]
      %v1310 = vld [vmem:[%s1308 + $0x8] sm:$0xff]
      %v1311 = vld [vmem:[%s1308 + $0x10] sm:$0xff]
      %v1312 = vld [vmem:[%s1308 + $0x18] sm:$0xff]
      %1314 = vset.pattern.permute.xlu0 0
      %1315 = vperm.xlu0 %1314, %v1309
      %v1316 = vpop.permute.xlu0 %1315
      %1319 = vset.pattern.permute.xlu0 0
      %1320 = vperm.xlu0 %1319, %v1310
      %v1321 = vpop.permute.xlu0 %1320
      %1324 = vset.pattern.permute.xlu0 0
      %1325 = vperm.xlu0 %1324, %v1311
      %v1326 = vpop.permute.xlu0 %1325
      %1329 = vset.pattern.permute.xlu0 0
      %1330 = vperm.xlu0 %1329, %v1312
      %v1331 = vpop.permute.xlu0 %1330
      %v1333 = vmul.f32 %v1300, %v1316
      %v1334 = vmul.f32 %v1301, %v1316
      %v1335 = vmul.f32 %v1302, %v1321
      %v1336 = vmul.f32 %v1303, %v1321
      %v1337 = vmul.f32 %v1304, %v1326
      %v1338 = vmul.f32 %v1305, %v1326
      %v1339 = vmul.f32 %v1306, %v1331
      %v1340 = vmul.f32 %v1307, %v1331
      %v1341 = vadd.f32 %v1254, %v1333
      %v1342 = vadd.f32 %v1255, %v1334
      %v1343 = vadd.f32 %v1256, %v1335
      %v1344 = vadd.f32 %v1257, %v1336
      %v1345 = vadd.f32 %v1258, %v1337
      %v1346 = vadd.f32 %v1259, %v1338
      %v1347 = vadd.f32 %v1260, %v1339
      %v1348 = vadd.f32 %v1261, %v1340
      %1349 = vrot.lane.b32.xlu0 %v279, 2
      %v1350 = vpop.permute.xlu0 %1349
      %1351 = vrot.lane.b32.xlu0 %v281, 2
      %v1352 = vpop.permute.xlu0 %1351
      %1353 = vrot.lane.b32.xlu0 %v283, 2
      %v1354 = vpop.permute.xlu0 %1353
      %1355 = vrot.lane.b32.xlu0 %v285, 2
      %v1356 = vpop.permute.xlu0 %1355
      %1357 = vrot.lane.b32.xlu0 %v280, 2
      %v1358 = vpop.permute.xlu0 %1357
      %1359 = vrot.lane.b32.xlu0 %v282, 2
      %v1360 = vpop.permute.xlu0 %1359
      %1361 = vrot.lane.b32.xlu0 %v284, 2
      %v1362 = vpop.permute.xlu0 %1361
      %1363 = vrot.lane.b32.xlu0 %v286, 2
      %v1364 = vpop.permute.xlu0 %1363
      %vm1365 = vcmp.lt.s32.totalorder %v304, 2
      %v1366 = vsel %vm1365, %v1350, %v1358
      %v1367 = vsel %vm1365, %v1352, %v1360
      %v1368 = vsel %vm1365, %v1354, %v1362
      %v1369 = vsel %vm1365, %v1356, %v1364
      %v1370 = vsel %vm1365, %v1358, %v1350
      %v1371 = vsel %vm1365, %v1360, %v1352
      %v1372 = vsel %vm1365, %v1362, %v1354
      %v1373 = vsel %vm1365, %v1364, %v1356
      %s1374 = scalar_lea.vmem %s2, 24
      %v1375 = vld [vmem:[%s1374] sm:$0x3]
      %v1377 = vlaneseq
      %v1378 = vshrl.u32 %v1377, 7
      %v1379 = vsub.s32 0, %v1378
      %v1380 = vrot.slane %v1375, %v1379
      %v1381 = vlaneseq
      %v1382 = vshrl.u32 %v1381, 7
      %v1383 = vsub.s32 1, %v1382
      %v1384 = vrot.slane %v1375, %v1383
      %v1387 = vmul.f32 %v1370, %v1380
      %v1388 = vmul.f32 %v1366, %v1384
      %v1389 = vmul.f32 %v1371, %v1380
      %v1390 = vmul.f32 %v1367, %v1384
      %v1391 = vmul.f32 %v1372, %v1380
      %v1392 = vmul.f32 %v1368, %v1384
      %v1393 = vmul.f32 %v1373, %v1380
      %v1394 = vmul.f32 %v1369, %v1384
      %s1395 = scalar_lea.vmem %s1, 384
      %v1396 = vld [vmem:[%s1395] sm:$0xff]
      %v1397 = vld [vmem:[%s1395 + $0x8] sm:$0xff]
      %v1398 = vld [vmem:[%s1395 + $0x10] sm:$0xff]
      %v1399 = vld [vmem:[%s1395 + $0x18] sm:$0xff]
      %1401 = vset.pattern.permute.xlu0 0
      %1402 = vperm.xlu0 %1401, %v1396
      %v1403 = vpop.permute.xlu0 %1402
      %1406 = vset.pattern.permute.xlu0 0
      %1407 = vperm.xlu0 %1406, %v1397
      %v1408 = vpop.permute.xlu0 %1407
      %1411 = vset.pattern.permute.xlu0 0
      %1412 = vperm.xlu0 %1411, %v1398
      %v1413 = vpop.permute.xlu0 %1412
      %1416 = vset.pattern.permute.xlu0 0
      %1417 = vperm.xlu0 %1416, %v1399
      %v1418 = vpop.permute.xlu0 %1417
      %v1420 = vmul.f32 %v1387, %v1403
      %v1421 = vmul.f32 %v1388, %v1403
      %v1422 = vmul.f32 %v1389, %v1408
      %v1423 = vmul.f32 %v1390, %v1408
      %v1424 = vmul.f32 %v1391, %v1413
      %v1425 = vmul.f32 %v1392, %v1413
      %v1426 = vmul.f32 %v1393, %v1418
      %v1427 = vmul.f32 %v1394, %v1418
      %v1428 = vadd.f32 %v1341, %v1420
      %v1429 = vadd.f32 %v1342, %v1421
      %v1430 = vadd.f32 %v1343, %v1422
      %v1431 = vadd.f32 %v1344, %v1423
      %v1432 = vadd.f32 %v1345, %v1424
      %v1433 = vadd.f32 %v1346, %v1425
      %v1434 = vadd.f32 %v1347, %v1426
      %v1435 = vadd.f32 %v1348, %v1427
      %s1436 = scalar_lea.vmem %s1, 416
      %v1437 = vld [vmem:[%s1436] sm:$0xff]
      %v1438 = vld [vmem:[%s1436 + $0x8] sm:$0xff]
      %v1439 = vld [vmem:[%s1436 + $0x10] sm:$0xff]
      %v1440 = vld [vmem:[%s1436 + $0x18] sm:$0xff]
      %1442 = vset.pattern.permute.xlu0 0
      %1443 = vperm.xlu0 %1442, %v1437
      %v1444 = vpop.permute.xlu0 %1443
      %1447 = vset.pattern.permute.xlu0 0
      %1448 = vperm.xlu0 %1447, %v1438
      %v1449 = vpop.permute.xlu0 %1448
      %1452 = vset.pattern.permute.xlu0 0
      %1453 = vperm.xlu0 %1452, %v1439
      %v1454 = vpop.permute.xlu0 %1453
      %1457 = vset.pattern.permute.xlu0 0
      %1458 = vperm.xlu0 %1457, %v1440
      %v1459 = vpop.permute.xlu0 %1458
      %v1461 = vmul.f32 %v279, %v1444
      %v1462 = vmul.f32 %v280, %v1444
      %v1463 = vmul.f32 %v281, %v1449
      %v1464 = vmul.f32 %v282, %v1449
      %v1465 = vmul.f32 %v283, %v1454
      %v1466 = vmul.f32 %v284, %v1454
      %v1467 = vmul.f32 %v285, %v1459
      %v1468 = vmul.f32 %v286, %v1459
      %v1469 = vadd.f32 %v1428, %v1461
      %v1470 = vadd.f32 %v1429, %v1462
      %v1471 = vadd.f32 %v1430, %v1463
      %v1472 = vadd.f32 %v1431, %v1464
      %v1473 = vadd.f32 %v1432, %v1465
      %v1474 = vadd.f32 %v1433, %v1466
      %v1475 = vadd.f32 %v1434, %v1467
      %v1476 = vadd.f32 %v1435, %v1468
      %1477 = vrot.lane.b32.xlu0 %v279, 126
      %v1478 = vpop.permute.xlu0 %1477
      %1479 = vrot.lane.b32.xlu0 %v281, 126
      %v1480 = vpop.permute.xlu0 %1479
      %1481 = vrot.lane.b32.xlu0 %v283, 126
      %v1482 = vpop.permute.xlu0 %1481
      %1483 = vrot.lane.b32.xlu0 %v285, 126
      %v1484 = vpop.permute.xlu0 %1483
      %1485 = vrot.lane.b32.xlu0 %v280, 126
      %v1486 = vpop.permute.xlu0 %1485
      %1487 = vrot.lane.b32.xlu0 %v282, 126
      %v1488 = vpop.permute.xlu0 %1487
      %1489 = vrot.lane.b32.xlu0 %v284, 126
      %v1490 = vpop.permute.xlu0 %1489
      %1491 = vrot.lane.b32.xlu0 %v286, 126
      %v1492 = vpop.permute.xlu0 %1491
      %vm1493 = vcmp.lt.s32.totalorder %v304, 126
      %v1494 = vsel %vm1493, %v1478, %v1486
      %v1495 = vsel %vm1493, %v1480, %v1488
      %v1496 = vsel %vm1493, %v1482, %v1490
      %v1497 = vsel %vm1493, %v1484, %v1492
      %v1498 = vsel %vm1493, %v1486, %v1478
      %v1499 = vsel %vm1493, %v1488, %v1480
      %v1500 = vsel %vm1493, %v1490, %v1482
      %v1501 = vsel %vm1493, %v1492, %v1484
      %s1502 = scalar_lea.vmem %s2, 28
      %v1503 = vld [vmem:[%s1502] sm:$0x3]
      %v1505 = vlaneseq
      %v1506 = vshrl.u32 %v1505, 7
      %v1507 = vsub.s32 0, %v1506
      %v1508 = vrot.slane %v1503, %v1507
      %v1509 = vlaneseq
      %v1510 = vshrl.u32 %v1509, 7
      %v1511 = vsub.s32 1, %v1510
      %v1512 = vrot.slane %v1503, %v1511
      %v1515 = vmul.f32 %v1494, %v1508
      %v1516 = vmul.f32 %v1498, %v1512
      %v1517 = vmul.f32 %v1495, %v1508
      %v1518 = vmul.f32 %v1499, %v1512
      %v1519 = vmul.f32 %v1496, %v1508
      %v1520 = vmul.f32 %v1500, %v1512
      %v1521 = vmul.f32 %v1497, %v1508
      %v1522 = vmul.f32 %v1501, %v1512
      %s1523 = scalar_lea.vmem %s1, 448
      %v1524 = vld [vmem:[%s1523] sm:$0xff]
      %v1525 = vld [vmem:[%s1523 + $0x8] sm:$0xff]
      %v1526 = vld [vmem:[%s1523 + $0x10] sm:$0xff]
      %v1527 = vld [vmem:[%s1523 + $0x18] sm:$0xff]
      %1529 = vset.pattern.permute.xlu0 0
      %1530 = vperm.xlu0 %1529, %v1524
      %v1531 = vpop.permute.xlu0 %1530
      %1534 = vset.pattern.permute.xlu0 0
      %1535 = vperm.xlu0 %1534, %v1525
      %v1536 = vpop.permute.xlu0 %1535
      %1539 = vset.pattern.permute.xlu0 0
      %1540 = vperm.xlu0 %1539, %v1526
      %v1541 = vpop.permute.xlu0 %1540
      %1544 = vset.pattern.permute.xlu0 0
      %1545 = vperm.xlu0 %1544, %v1527
      %v1546 = vpop.permute.xlu0 %1545
      %v1548 = vmul.f32 %v1515, %v1531
      %v1549 = vmul.f32 %v1516, %v1531
      %v1550 = vmul.f32 %v1517, %v1536
      %v1551 = vmul.f32 %v1518, %v1536
      %v1552 = vmul.f32 %v1519, %v1541
      %v1553 = vmul.f32 %v1520, %v1541
      %v1554 = vmul.f32 %v1521, %v1546
      %v1555 = vmul.f32 %v1522, %v1546
      %v1556 = vadd.f32 %v1469, %v1548
      %v1557 = vadd.f32 %v1470, %v1549
      %v1558 = vadd.f32 %v1471, %v1550
      %v1559 = vadd.f32 %v1472, %v1551
      %v1560 = vadd.f32 %v1473, %v1552
      %v1561 = vadd.f32 %v1474, %v1553
      %v1562 = vadd.f32 %v1475, %v1554
      %v1563 = vadd.f32 %v1476, %v1555
      %1564 = vrot.lane.b32.xlu0 %v279, 98
      %v1565 = vpop.permute.xlu0 %1564
      %1566 = vrot.lane.b32.xlu0 %v281, 98
      %v1567 = vpop.permute.xlu0 %1566
      %1568 = vrot.lane.b32.xlu0 %v283, 98
      %v1569 = vpop.permute.xlu0 %1568
      %1570 = vrot.lane.b32.xlu0 %v285, 98
      %v1571 = vpop.permute.xlu0 %1570
      %1572 = vrot.lane.b32.xlu0 %v280, 98
      %v1573 = vpop.permute.xlu0 %1572
      %1574 = vrot.lane.b32.xlu0 %v282, 98
      %v1575 = vpop.permute.xlu0 %1574
      %1576 = vrot.lane.b32.xlu0 %v284, 98
      %v1577 = vpop.permute.xlu0 %1576
      %1578 = vrot.lane.b32.xlu0 %v286, 98
      %v1579 = vpop.permute.xlu0 %1578
      %vm1580 = vcmp.lt.s32.totalorder %v304, 98
      %v1581 = vsel %vm1580, %v1565, %v1573
      %v1582 = vsel %vm1580, %v1567, %v1575
      %v1583 = vsel %vm1580, %v1569, %v1577
      %v1584 = vsel %vm1580, %v1571, %v1579
      %v1585 = vsel %vm1580, %v1573, %v1565
      %v1586 = vsel %vm1580, %v1575, %v1567
      %v1587 = vsel %vm1580, %v1577, %v1569
      %v1588 = vsel %vm1580, %v1579, %v1571
      %s1589 = scalar_lea.vmem %s2, 30
      %v1590 = vld [vmem:[%s1589] sm:$0x3]
      %v1592 = vlaneseq
      %v1593 = vshrl.u32 %v1592, 7
      %v1594 = vsub.s32 0, %v1593
      %v1595 = vrot.slane %v1590, %v1594
      %v1596 = vlaneseq
      %v1597 = vshrl.u32 %v1596, 7
      %v1598 = vsub.s32 1, %v1597
      %v1599 = vrot.slane %v1590, %v1598
      %v1602 = vmul.f32 %v1581, %v1595
      %v1603 = vmul.f32 %v1585, %v1599
      %v1604 = vmul.f32 %v1582, %v1595
      %v1605 = vmul.f32 %v1586, %v1599
      %v1606 = vmul.f32 %v1583, %v1595
      %v1607 = vmul.f32 %v1587, %v1599
      %v1608 = vmul.f32 %v1584, %v1595
      %v1609 = vmul.f32 %v1588, %v1599
      %s1610 = scalar_lea.vmem %s1, 480
      %v1611 = vld [vmem:[%s1610] sm:$0xff]
      %v1612 = vld [vmem:[%s1610 + $0x8] sm:$0xff]
      %v1613 = vld [vmem:[%s1610 + $0x10] sm:$0xff]
      %v1614 = vld [vmem:[%s1610 + $0x18] sm:$0xff]
      %1616 = vset.pattern.permute.xlu0 0
      %1617 = vperm.xlu0 %1616, %v1611
      %v1618 = vpop.permute.xlu0 %1617
      %1621 = vset.pattern.permute.xlu0 0
      %1622 = vperm.xlu0 %1621, %v1612
      %v1623 = vpop.permute.xlu0 %1622
      %1626 = vset.pattern.permute.xlu0 0
      %1627 = vperm.xlu0 %1626, %v1613
      %v1628 = vpop.permute.xlu0 %1627
      %1631 = vset.pattern.permute.xlu0 0
      %1632 = vperm.xlu0 %1631, %v1614
      %v1633 = vpop.permute.xlu0 %1632
      %v1635 = vmul.f32 %v1602, %v1618
      %v1636 = vmul.f32 %v1603, %v1618
      %v1637 = vmul.f32 %v1604, %v1623
      %v1638 = vmul.f32 %v1605, %v1623
      %v1639 = vmul.f32 %v1606, %v1628
      %v1640 = vmul.f32 %v1607, %v1628
      %v1641 = vmul.f32 %v1608, %v1633
      %v1642 = vmul.f32 %v1609, %v1633
      %v1643 = vadd.f32 %v1556, %v1635
      %v1644 = vadd.f32 %v1557, %v1636
      %v1645 = vadd.f32 %v1558, %v1637
      %v1646 = vadd.f32 %v1559, %v1638
      %v1647 = vadd.f32 %v1560, %v1639
      %v1648 = vadd.f32 %v1561, %v1640
      %v1649 = vadd.f32 %v1562, %v1641
      %v1650 = vadd.f32 %v1563, %v1642
      %1651 = vrot.lane.b32.xlu0 %v279, 96
      %v1652 = vpop.permute.xlu0 %1651
      %1653 = vrot.lane.b32.xlu0 %v281, 96
      %v1654 = vpop.permute.xlu0 %1653
      %1655 = vrot.lane.b32.xlu0 %v283, 96
      %v1656 = vpop.permute.xlu0 %1655
      %1657 = vrot.lane.b32.xlu0 %v285, 96
      %v1658 = vpop.permute.xlu0 %1657
      %1659 = vrot.lane.b32.xlu0 %v280, 96
      %v1660 = vpop.permute.xlu0 %1659
      %1661 = vrot.lane.b32.xlu0 %v282, 96
      %v1662 = vpop.permute.xlu0 %1661
      %1663 = vrot.lane.b32.xlu0 %v284, 96
      %v1664 = vpop.permute.xlu0 %1663
      %1665 = vrot.lane.b32.xlu0 %v286, 96
      %v1666 = vpop.permute.xlu0 %1665
      %vm1667 = vcmp.lt.s32.totalorder %v304, 96
      %v1668 = vsel %vm1667, %v1652, %v1660
      %v1669 = vsel %vm1667, %v1654, %v1662
      %v1670 = vsel %vm1667, %v1656, %v1664
      %v1671 = vsel %vm1667, %v1658, %v1666
      %v1672 = vsel %vm1667, %v1660, %v1652
      %v1673 = vsel %vm1667, %v1662, %v1654
      %v1674 = vsel %vm1667, %v1664, %v1656
      %v1675 = vsel %vm1667, %v1666, %v1658
      %s1676 = scalar_lea.vmem %s2, 32
      %v1677 = vld [vmem:[%s1676] sm:$0x3]
      %v1679 = vlaneseq
      %v1680 = vshrl.u32 %v1679, 7
      %v1681 = vsub.s32 0, %v1680
      %v1682 = vrot.slane %v1677, %v1681
      %v1683 = vlaneseq
      %v1684 = vshrl.u32 %v1683, 7
      %v1685 = vsub.s32 1, %v1684
      %v1686 = vrot.slane %v1677, %v1685
      %v1689 = vmul.f32 %v1668, %v1682
      %v1690 = vmul.f32 %v1672, %v1686
      %v1691 = vmul.f32 %v1669, %v1682
      %v1692 = vmul.f32 %v1673, %v1686
      %v1693 = vmul.f32 %v1670, %v1682
      %v1694 = vmul.f32 %v1674, %v1686
      %v1695 = vmul.f32 %v1671, %v1682
      %v1696 = vmul.f32 %v1675, %v1686
      %s1697 = scalar_lea.vmem %s1, 512
      %v1698 = vld [vmem:[%s1697] sm:$0xff]
      %v1699 = vld [vmem:[%s1697 + $0x8] sm:$0xff]
      %v1700 = vld [vmem:[%s1697 + $0x10] sm:$0xff]
      %v1701 = vld [vmem:[%s1697 + $0x18] sm:$0xff]
      %1703 = vset.pattern.permute.xlu0 0
      %1704 = vperm.xlu0 %1703, %v1698
      %v1705 = vpop.permute.xlu0 %1704
      %1708 = vset.pattern.permute.xlu0 0
      %1709 = vperm.xlu0 %1708, %v1699
      %v1710 = vpop.permute.xlu0 %1709
      %1713 = vset.pattern.permute.xlu0 0
      %1714 = vperm.xlu0 %1713, %v1700
      %v1715 = vpop.permute.xlu0 %1714
      %1718 = vset.pattern.permute.xlu0 0
      %1719 = vperm.xlu0 %1718, %v1701
      %v1720 = vpop.permute.xlu0 %1719
      %v1722 = vmul.f32 %v1689, %v1705
      %v1723 = vmul.f32 %v1690, %v1705
      %v1724 = vmul.f32 %v1691, %v1710
      %v1725 = vmul.f32 %v1692, %v1710
      %v1726 = vmul.f32 %v1693, %v1715
      %v1727 = vmul.f32 %v1694, %v1715
      %v1728 = vmul.f32 %v1695, %v1720
      %v1729 = vmul.f32 %v1696, %v1720
      %v1730 = vadd.f32 %v1643, %v1722
      %v1731 = vadd.f32 %v1644, %v1723
      %v1732 = vadd.f32 %v1645, %v1724
      %v1733 = vadd.f32 %v1646, %v1725
      %v1734 = vadd.f32 %v1647, %v1726
      %v1735 = vadd.f32 %v1648, %v1727
      %v1736 = vadd.f32 %v1649, %v1728
      %v1737 = vadd.f32 %v1650, %v1729
      %1738 = vrot.lane.b32.xlu0 %v279, 94
      %v1739 = vpop.permute.xlu0 %1738
      %1740 = vrot.lane.b32.xlu0 %v281, 94
      %v1741 = vpop.permute.xlu0 %1740
      %1742 = vrot.lane.b32.xlu0 %v283, 94
      %v1743 = vpop.permute.xlu0 %1742
      %1744 = vrot.lane.b32.xlu0 %v285, 94
      %v1745 = vpop.permute.xlu0 %1744
      %1746 = vrot.lane.b32.xlu0 %v280, 94
      %v1747 = vpop.permute.xlu0 %1746
      %1748 = vrot.lane.b32.xlu0 %v282, 94
      %v1749 = vpop.permute.xlu0 %1748
      %1750 = vrot.lane.b32.xlu0 %v284, 94
      %v1751 = vpop.permute.xlu0 %1750
      %1752 = vrot.lane.b32.xlu0 %v286, 94
      %v1753 = vpop.permute.xlu0 %1752
      %vm1754 = vcmp.lt.s32.totalorder %v304, 94
      %v1755 = vsel %vm1754, %v1739, %v1747
      %v1756 = vsel %vm1754, %v1741, %v1749
      %v1757 = vsel %vm1754, %v1743, %v1751
      %v1758 = vsel %vm1754, %v1745, %v1753
      %v1759 = vsel %vm1754, %v1747, %v1739
      %v1760 = vsel %vm1754, %v1749, %v1741
      %v1761 = vsel %vm1754, %v1751, %v1743
      %v1762 = vsel %vm1754, %v1753, %v1745
      %s1763 = scalar_lea.vmem %s2, 34
      %v1764 = vld [vmem:[%s1763] sm:$0x3]
      %v1766 = vlaneseq
      %v1767 = vshrl.u32 %v1766, 7
      %v1768 = vsub.s32 0, %v1767
      %v1769 = vrot.slane %v1764, %v1768
      %v1770 = vlaneseq
      %v1771 = vshrl.u32 %v1770, 7
      %v1772 = vsub.s32 1, %v1771
      %v1773 = vrot.slane %v1764, %v1772
      %v1776 = vmul.f32 %v1755, %v1769
      %v1777 = vmul.f32 %v1759, %v1773
      %v1778 = vmul.f32 %v1756, %v1769
      %v1779 = vmul.f32 %v1760, %v1773
      %v1780 = vmul.f32 %v1757, %v1769
      %v1781 = vmul.f32 %v1761, %v1773
      %v1782 = vmul.f32 %v1758, %v1769
      %v1783 = vmul.f32 %v1762, %v1773
      %s1784 = scalar_lea.vmem %s1, 544
      %v1785 = vld [vmem:[%s1784] sm:$0xff]
      %v1786 = vld [vmem:[%s1784 + $0x8] sm:$0xff]
      %v1787 = vld [vmem:[%s1784 + $0x10] sm:$0xff]
      %v1788 = vld [vmem:[%s1784 + $0x18] sm:$0xff]
      %1790 = vset.pattern.permute.xlu0 0
      %1791 = vperm.xlu0 %1790, %v1785
      %v1792 = vpop.permute.xlu0 %1791
      %1795 = vset.pattern.permute.xlu0 0
      %1796 = vperm.xlu0 %1795, %v1786
      %v1797 = vpop.permute.xlu0 %1796
      %1800 = vset.pattern.permute.xlu0 0
      %1801 = vperm.xlu0 %1800, %v1787
      %v1802 = vpop.permute.xlu0 %1801
      %1805 = vset.pattern.permute.xlu0 0
      %1806 = vperm.xlu0 %1805, %v1788
      %v1807 = vpop.permute.xlu0 %1806
      %v1809 = vmul.f32 %v1776, %v1792
      %v1810 = vmul.f32 %v1777, %v1792
      %v1811 = vmul.f32 %v1778, %v1797
      %v1812 = vmul.f32 %v1779, %v1797
      %v1813 = vmul.f32 %v1780, %v1802
      %v1814 = vmul.f32 %v1781, %v1802
      %v1815 = vmul.f32 %v1782, %v1807
      %v1816 = vmul.f32 %v1783, %v1807
      %v1817 = vadd.f32 %v1730, %v1809
      %v1818 = vadd.f32 %v1731, %v1810
      %v1819 = vadd.f32 %v1732, %v1811
      %v1820 = vadd.f32 %v1733, %v1812
      %v1821 = vadd.f32 %v1734, %v1813
      %v1822 = vadd.f32 %v1735, %v1814
      %v1823 = vadd.f32 %v1736, %v1815
      %v1824 = vadd.f32 %v1737, %v1816
      %s1825 = scalar_lea.vmem %s3, 32
      %v1826 = vld [vmem:[%s1825] sm:$0xff]
      %v1827 = vld [vmem:[%s1825 + $0x8] sm:$0xff]
      %v1828 = vld [vmem:[%s1825 + $0x10] sm:$0xff]
      %v1829 = vld [vmem:[%s1825 + $0x18] sm:$0xff]
      %1831 = vset.pattern.permute.xlu0 0
      %1832 = vperm.xlu0 %1831, %v1826
      %v1833 = vpop.permute.xlu0 %1832
      %1836 = vset.pattern.permute.xlu0 0
      %1837 = vperm.xlu0 %1836, %v1827
      %v1838 = vpop.permute.xlu0 %1837
      %1841 = vset.pattern.permute.xlu0 0
      %1842 = vperm.xlu0 %1841, %v1828
      %v1843 = vpop.permute.xlu0 %1842
      %1846 = vset.pattern.permute.xlu0 0
      %1847 = vperm.xlu0 %1846, %v1829
      %v1848 = vpop.permute.xlu0 %1847
      %v1850 = vadd.f32 %v1817, %v1833
      %v1851 = vadd.f32 %v1818, %v1833
      %v1852 = vadd.f32 %v1819, %v1838
      %v1853 = vadd.f32 %v1820, %v1838
      %v1854 = vadd.f32 %v1821, %v1843
      %v1855 = vadd.f32 %v1822, %v1843
      %v1856 = vadd.f32 %v1823, %v1848
      %v1857 = vadd.f32 %v1824, %v1848
      %v1858 = vmax.f32 %v1850, 0.0
      %v1859 = vmax.f32 %v1851, 0.0
      %v1860 = vmax.f32 %v1852, 0.0
      %v1861 = vmax.f32 %v1853, 0.0
      %v1862 = vmax.f32 %v1854, 0.0
      %v1863 = vmax.f32 %v1855, 0.0
      %v1864 = vmax.f32 %v1856, 0.0
      %v1865 = vmax.f32 %v1857, 0.0
      %s1866 = scalar_lea.vmem [#allocation2], 64
      %1867 = vst [vmem:[%s1866] sm:$0xff] %v1858
      %1868 = vst [vmem:[%s1866 + $0x8] sm:$0xff] %v1859
      %1869 = vst [vmem:[%s1866 + $0x10] sm:$0xff] %v1860
      %1870 = vst [vmem:[%s1866 + $0x18] sm:$0xff] %v1861
      %1871 = vst [vmem:[%s1866 + $0x20] sm:$0xff] %v1862
      %1872 = vst [vmem:[%s1866 + $0x28] sm:$0xff] %v1863
      %1873 = vst [vmem:[%s1866 + $0x30] sm:$0xff] %v1864
      %1874 = vst [vmem:[%s1866 + $0x38] sm:$0xff] %v1865
      %v1875 = vadd.f32 %v1858, %v1859
      %1876 = vadd.xlane.f32.xlu0 %v1875
      %v1877 = vpop.xlane.xlu0 %1876
      %v1878 = vadd.f32 %v1860, %v1861
      %1879 = vadd.xlane.f32.xlu0 %v1878
      %v1880 = vpop.xlane.xlu0 %1879
      %v1881 = vadd.f32 %v1862, %v1863
      %1882 = vadd.xlane.f32.xlu0 %v1881
      %v1883 = vpop.xlane.xlu0 %1882
      %v1884 = vadd.f32 %v1864, %v1865
      %1885 = vadd.xlane.f32.xlu0 %v1884
      %v1886 = vpop.xlane.xlu0 %1885
      %v1887 = vadd.f32 %v1084, %v1877
      %v1888 = vadd.f32 %v1085, %v1880
      %v1889 = vadd.f32 %v1086, %v1883
      %v1890 = vadd.f32 %v1087, %v1886
      %v1891 = vmul.f32 %v1887, 0.00390625
      %v1892 = vmul.f32 %v1888, 0.00390625
      %v1893 = vmul.f32 %v1889, 0.00390625
      %v1894 = vmul.f32 %v1890, 0.00390625
      %v1895 = vld [vmem:[%s4] sm:$0xff]
      %v1896 = vld [vmem:[%s4 + $0x8] sm:$0xff]
      %v1897 = vld [vmem:[%s4 + $0x10] sm:$0xff]
      %v1898 = vld [vmem:[%s4 + $0x18] sm:$0xff]
      %v1899 = vmul.f32 %v1895, %v1891
      %v1900 = vmul.f32 %v1896, %v1892
      %v1901 = vmul.f32 %v1897, %v1893
      %v1902 = vmul.f32 %v1898, %v1894
      %vm1903 = vcmask 261120
      %v1904 = vsel %vm1903, %v1899, 0.0
      %v1905 = vsel %vm1903, %v1900, 0.0
      %v1906 = vadd.f32 %v1904, %v1905
      %v1907 = vsel %vm1903, %v1901, 0.0
      %v1908 = vadd.f32 %v1906, %v1907
      %v1909 = vsel %vm1903, %v1902, 0.0
      %v1910 = vadd.f32 %v1908, %v1909
      %v1911 = vrot.slane %v1910, 4
      %v1912 = vadd.f32 %v1910, %v1911
      %v1913 = vrot.slane %v1912, 2
      %v1914 = vadd.f32 %v1912, %v1913
      %v1915 = vrot.slane %v1914, 1
      %v1916 = vadd.f32 %v1914, %v1915
      %v1917 = vld [vmem:[%s5] sm:$0x1]
      %v1918 = vadd.f32 %v1916, %v1917
      %v1919 = vmax.f32 %v1918, 0.0
      %v1920 = vld [vmem:[%s6] sm:$0xff]
      %v1921 = vld [vmem:[%s6 + $0x8] sm:$0xff]
      %v1922 = vld [vmem:[%s6 + $0x10] sm:$0xff]
      %v1923 = vld [vmem:[%s6 + $0x18] sm:$0xff]
      %v1924 = vlaneseq
      %v1925 = vshrl.u32 %v1924, 7
      %v1926 = vsub.s32 0, %v1925
      %v1927 = vrot.slane %v1919, %v1926
      %v1928 = vmul.f32 %v1920, %v1927
      %v1929 = vmul.f32 %v1921, %v1927
      %v1930 = vmul.f32 %v1922, %v1927
      %v1931 = vmul.f32 %v1923, %v1927
      %v1932 = vsel %vm1903, %v1928, 0.0
      %1933 = vadd.xlane.f32.xlu0 %v1932
      %v1934 = vpop.xlane.xlu0 %1933
      %v1935 = vsel %vm1903, %v1929, 0.0
      %1936 = vadd.xlane.f32.xlu0 %v1935
      %v1937 = vpop.xlane.xlu0 %1936
      %v1938 = vsel %vm1903, %v1930, 0.0
      %1939 = vadd.xlane.f32.xlu0 %v1938
      %v1940 = vpop.xlane.xlu0 %1939
      %v1941 = vsel %vm1903, %v1931, 0.0
      %1942 = vadd.xlane.f32.xlu0 %v1941
      %v1943 = vpop.xlane.xlu0 %1942
      %s1944 = scalar_lea.vmem %s6, 32
      %v1945 = vld [vmem:[%s1944] sm:$0xff]
      %v1946 = vld [vmem:[%s1944 + $0x8] sm:$0xff]
      %v1947 = vld [vmem:[%s1944 + $0x10] sm:$0xff]
      %v1948 = vld [vmem:[%s1944 + $0x18] sm:$0xff]
      %v1949 = vmul.f32 %v1945, %v1927
      %v1950 = vmul.f32 %v1946, %v1927
      %v1951 = vmul.f32 %v1947, %v1927
      %v1952 = vmul.f32 %v1948, %v1927
      %v1953 = vsel %vm1903, %v1949, 0.0
      %1954 = vadd.xlane.f32.xlu0 %v1953
      %v1955 = vpop.xlane.xlu0 %1954
      %v1956 = vsel %vm1903, %v1950, 0.0
      %1957 = vadd.xlane.f32.xlu0 %v1956
      %v1958 = vpop.xlane.xlu0 %1957
      %v1959 = vsel %vm1903, %v1951, 0.0
      %1960 = vadd.xlane.f32.xlu0 %v1959
      %v1961 = vpop.xlane.xlu0 %1960
      %v1962 = vsel %vm1903, %v1952, 0.0
      %1963 = vadd.xlane.f32.xlu0 %v1962
      %v1964 = vpop.xlane.xlu0 %1963
      %v1965 = vmax.f32 %v1934, %v1955
      %v1966 = vmax.f32 %v1937, %v1958
      %v1967 = vmax.f32 %v1940, %v1961
      %v1968 = vmax.f32 %v1943, %v1964
      %v1969 = vsub.f32 %v1934, %v1965
      %v1970 = vsub.f32 %v1937, %v1966
      %v1971 = vsub.f32 %v1940, %v1967
      %v1972 = vsub.f32 %v1943, %v1968
      %v1973 = vmul.f32 %v1969, 1.442695
      %v1974 = vpow.pop %v1973
      %v1975 = vmul.f32 %v1970, 1.442695
      %v1976 = vpow.pop %v1975
      %v1977 = vmul.f32 %v1971, 1.442695
      %v1978 = vpow.pop %v1977
      %v1979 = vmul.f32 %v1972, 1.442695
      %v1980 = vpow.pop %v1979
      %v1981 = vsub.f32 %v1955, %v1965
      %v1982 = vsub.f32 %v1958, %v1966
      %v1983 = vsub.f32 %v1961, %v1967
      %v1984 = vsub.f32 %v1964, %v1968
      %v1985 = vmul.f32 %v1981, 1.442695
      %v1986 = vpow.pop %v1985
      %v1987 = vmul.f32 %v1982, 1.442695
      %v1988 = vpow.pop %v1987
      %v1989 = vmul.f32 %v1983, 1.442695
      %v1990 = vpow.pop %v1989
      %v1991 = vmul.f32 %v1984, 1.442695
      %v1992 = vpow.pop %v1991
      %v1993 = vadd.f32 %v1974, %v1986
      %v1994 = vadd.f32 %v1976, %v1988
      %v1995 = vadd.f32 %v1978, %v1990
      %v1996 = vadd.f32 %v1980, %v1992
      %v1997 = vrcp.pop %v1993
      %v1998 = vrcp.pop %v1994
      %v1999 = vrcp.pop %v1995
      %v2000 = vrcp.pop %v1996
      %v2001 = vld [vmem:[#allocation2] sm:$0xff]
      %v2002 = vld [vmem:[#allocation2 + $0x8] sm:$0xff]
      %v2003 = vld [vmem:[#allocation2 + $0x10] sm:$0xff]
      %v2004 = vld [vmem:[#allocation2 + $0x18] sm:$0xff]
      %v2005 = vld [vmem:[#allocation2 + $0x20] sm:$0xff]
      %v2006 = vld [vmem:[#allocation2 + $0x28] sm:$0xff]
      %v2007 = vld [vmem:[#allocation2 + $0x30] sm:$0xff]
      %v2008 = vld [vmem:[#allocation2 + $0x38] sm:$0xff]
      %v2009 = vmul.f32 %v1974, %v1997
      %v2010 = vmul.f32 %v1976, %v1998
      %v2011 = vmul.f32 %v1978, %v1999
      %v2012 = vmul.f32 %v1980, %v2000
      %v2013 = vmul.f32 %v2001, %v2009
      %v2014 = vmul.f32 %v2002, %v2009
      %v2015 = vmul.f32 %v2003, %v2010
      %v2016 = vmul.f32 %v2004, %v2010
      %v2017 = vmul.f32 %v2005, %v2011
      %v2018 = vmul.f32 %v2006, %v2011
      %v2019 = vmul.f32 %v2007, %v2012
      %v2020 = vmul.f32 %v2008, %v2012
      %v2021 = vld [vmem:[%s1866] sm:$0xff]
      %v2022 = vld [vmem:[%s1866 + $0x8] sm:$0xff]
      %v2023 = vld [vmem:[%s1866 + $0x10] sm:$0xff]
      %v2024 = vld [vmem:[%s1866 + $0x18] sm:$0xff]
      %v2025 = vld [vmem:[%s1866 + $0x20] sm:$0xff]
      %v2026 = vld [vmem:[%s1866 + $0x28] sm:$0xff]
      %v2027 = vld [vmem:[%s1866 + $0x30] sm:$0xff]
      %v2028 = vld [vmem:[%s1866 + $0x38] sm:$0xff]
      %v2029 = vmul.f32 %v1986, %v1997
      %v2030 = vmul.f32 %v1988, %v1998
      %v2031 = vmul.f32 %v1990, %v1999
      %v2032 = vmul.f32 %v1992, %v2000
      %v2033 = vmul.f32 %v2021, %v2029
      %v2034 = vmul.f32 %v2022, %v2029
      %v2035 = vmul.f32 %v2023, %v2030
      %v2036 = vmul.f32 %v2024, %v2030
      %v2037 = vmul.f32 %v2025, %v2031
      %v2038 = vmul.f32 %v2026, %v2031
      %v2039 = vmul.f32 %v2027, %v2032
      %v2040 = vmul.f32 %v2028, %v2032
      %v2041 = vadd.f32 %v2013, %v2033
      %v2042 = vadd.f32 %v2014, %v2034
      %v2043 = vadd.f32 %v2015, %v2035
      %v2044 = vadd.f32 %v2016, %v2036
      %v2045 = vadd.f32 %v2017, %v2037
      %v2046 = vadd.f32 %v2018, %v2038
      %v2047 = vadd.f32 %v2019, %v2039
      %v2048 = vadd.f32 %v2020, %v2040
      %2049 = vst [vmem:[%s278] sm:$0xff] %v2041
      %2050 = vst [vmem:[%s278 + $0x8] sm:$0xff] %v2042
      %2051 = vst [vmem:[%s278 + $0x10] sm:$0xff] %v2043
      %2052 = vst [vmem:[%s278 + $0x18] sm:$0xff] %v2044
      %2053 = vst [vmem:[%s278 + $0x20] sm:$0xff] %v2045
      %2054 = vst [vmem:[%s278 + $0x28] sm:$0xff] %v2046
      %2055 = vst [vmem:[%s278 + $0x30] sm:$0xff] %v2047
      %2056 = vst [vmem:[%s278 + $0x38] sm:$0xff] %v2048
      %p2057 = scmp.lt.s32.totalorder %s18, 1
      %s2058 = scalar_select %p2057, %s18, 1
      %s2059 = smul.addr %s2058, 8
      %s2060 = smul.addr %s2059, 8
      %s2061 = scalar_lea.vmem %s7, %s2060
      // Predicated region
      $region49: #{sknet_pallas.1} parent=47 // pred_check
        %p2062 = pneg %p188
      $region50: #{sknet_pallas.1} parent=47 // pred_check_branch
        %2064 = sbr.rel (%p2062) target = $region52
      $region51: #{sknet_pallas.1} parent=47 // pred_region
        _
      $region52: #{sknet_pallas.1} parent=47 // pred_fallthru
        _
    $region48: #{sknet_pallas.1} parent=5 // pred_fallthru
      _
    %p2065 = scmp.le.s32.totalorder 2, %s13
    // Predicated region
    $region53: #{sknet_pallas.1} parent=5 // pred_check
      %p2066 = pneg %p2065
    $region54: #{sknet_pallas.1} parent=5 // pred_check_branch
      %2068 = sbr.rel (%p2066) target = $region56
    $region55: #{sknet_pallas.1} parent=5 // pred_region
      %s2069 = ssub.s32 %s13, 2
      // Predicated region
      $region57: #{sknet_pallas.1} parent=55 // pred_check
        %p2070 = pneg %p194
      $region58: #{sknet_pallas.1} parent=55 // pred_check_branch
        %2072 = sbr.rel (%p2070) target = $region60
      $region59: #{sknet_pallas.1} parent=55 // pred_region
        %p2073 = scmp.lt.s32.totalorder %s19, 1
        %s2074 = scalar_select %p2073, %s19, 1
        %s2075 = smul.addr %s2074, 8
        %s2076 = smul.addr %s2075, 8
        %s2077 = scalar_lea.vmem %s7, %s2076
      $region60: #{sknet_pallas.1} parent=55 // pred_fallthru
        _
    $region56: #{sknet_pallas.1} parent=5 // pred_fallthru
      _
  $region6: #{sknet_pallas.1} parent=0 // loop_footer
    %s17 = sadd.s32 1, %s13
  $region7: #{sknet_pallas.1} parent=0 // loop_footer_branch
    %12 = sbr.rel target = $region3
  $region8: #{sknet_pallas.1} parent=0 // loop_exit
    _

</llo_original>
